<compile_context>
chip_gen: v6e
topology: v6e:2x2x1
jax: 0.10.0
libtpu: 0.0.40
codegen_flags: <defaults>
</compile_context>

<pallas_src>
import numpy as np
import jax
import jax.numpy as jnp
from jax.experimental import pallas as pl
from jax.experimental.pallas import tpu as pltpu

LATENT_DIM = 16
BATCH = 2
H0 = W0 = 7              # spatial grid produced by fc1 (x.view(-1, 64, 7, 7))
C0, C1, C2 = 64, 32, 1   # channels: fc output / conv_t1 output / conv_t2 output
KSIZE = 3
PHASES = 16              # 4 phases of conv_t1 x 4 phases of conv_t2 (C2 == 1)


# ------------------------------ Pallas kernel -------------------------------

def _decoder_kernel(z_ref, mask_ref, pfc_ref, bfc_ref, w1_ref, b1_ref,
                    w2_ref, b2_ref, o_ref):
    f32 = jnp.float32
    nb, latent = z_ref.shape                      # (B, latent) scalars in SMEM
    nrows = o_ref.shape[0]                        # B * 49 rows = (batch, m, n)

    # (R,1) boundary masks: rows with n==6 / m==6 / either, zeroed.
    mask_n = mask_ref[0]                          # x(m, n+1) valid
    mask_m = mask_ref[1]                          # x(m+1, n) valid
    mask_nm = mask_ref[2]                         # x(m+1, n+1) valid

    def shifted_cat(x):
        """[x, x(m,n+1), x(m+1,n), x(m+1,n+1)] lane-concatenated, masked, bf16.

        Row shifts by +1 / +7 / +8 on the (b, m, n)-flattened row axis; every
        row that would cross an image/row boundary is exactly one of the rows
        zeroed by the masks, so static slices of a zero-padded copy are exact.
        """
        c = x.shape[1]
        xp = jnp.concatenate([x, jnp.zeros((W0 + 1, c), f32)], axis=0)
        x_cat = jnp.concatenate(
            [x,
             xp[1:1 + nrows, :] * mask_n,
             xp[W0:W0 + nrows, :] * mask_m,
             xp[W0 + 1:W0 + 1 + nrows, :] * mask_nm],
            axis=1)
        return x_cat.astype(jnp.bfloat16)

    # ---- fc1 + ReLU, produced directly in channels-last (B*49, 64) layout ----
    # Un-replicated per-position weight, z read as SMEM scalars; latent=16 so
    # this is a handful of VPU broadcast-MACs (DMA bytes were the real cost).
    hs = [bfc_ref[...]] * nb                      # (49, 64) f32 bias per image
    for l in range(latent):
        slab = pfc_ref[l].astype(f32)             # (49, 64)
        hs = [hs[b] + z_ref[b, l] * slab for b in range(nb)]
    h = jnp.maximum(jnp.concatenate(hs, axis=0), 0.0)          # (B*49, 64)

    # ---- conv_t1 (stride 2, 4-phase) + ReLU: ONE MXU matmul (R,256)x(256,128)
    y1 = jnp.dot(shifted_cat(h), w1_ref[...],
                 preferred_element_type=f32) + b1_ref[...]
    y1 = jnp.maximum(y1, 0.0)                                   # (B*49, 128)

    # ---- conv_t2 (stride 2, 4-phase) + sigmoid: ONE MXU matmul (R,512)x(512,16)
    y2 = jnp.dot(shifted_cat(y1), w2_ref[...],
                 preferred_element_type=f32) + b2_ref[...]
    o_ref[...] = jax.nn.sigmoid(y2)                             # (B*49, 16)


def _decoder_pallas(packed, z):
    nrows = z.shape[0] * H0 * W0
    vmem = pl.BlockSpec(memory_space=pltpu.MemorySpace.VMEM)
    smem = pl.BlockSpec(memory_space=pltpu.MemorySpace.SMEM)
    return pl.pallas_call(
        _decoder_kernel,
        out_shape=jax.ShapeDtypeStruct((nrows, PHASES), jnp.float32),
        in_specs=[smem, vmem, vmem, vmem, vmem, vmem, vmem, vmem],
        out_specs=vmem,
    )(z, packed["masks"], packed["pfc"], packed["bfc"],
      packed["w1"], packed["b1"], packed["w2"], packed["b2"])


# -------------------- offline (init-time) parameter packing -----------------

_SHIFT_IDX = {(0, 0): 0, (0, 1): 1, (1, 0): 2, (1, 1): 3}


def _parity_terms(par):
    # ConvTranspose2d(k=3, s=2, p=1, op=1): output row 2*q+par reads input row
    # q+d through kernel tap k, for (k, d) in:
    return [(1, 0)] if par == 0 else [(2, 0), (0, 1)]


def _pack_conv1(w):
    """(Cin,Cout,3,3) ConvTranspose2d weight -> (4, Cin, 4*Cout) phase weight."""
    cin, cout = w.shape[:2]
    out = np.zeros((4, cin, 4 * cout), np.float32)
    for dh in (0, 1):
        for dw in (0, 1):
            c0 = (2 * dh + dw) * cout
            for kh, dm in _parity_terms(dh):
                for kw, dn in _parity_terms(dw):
                    out[_SHIFT_IDX[(dm, dn)], :, c0:c0 + cout] += w[:, :, kh, kw]
    return out


def _pack_conv2(w):
    """(Cin,1,3,3) ConvTranspose2d weight -> (4, 4*Cin, 16) phase weight that
    acts directly on the phase-packed 14x14 map produced by the first conv."""
    cin = w.shape[0]
    v = w[:, 0]                                          # (Cin, 3, 3)
    out = np.zeros((4, 4 * cin, 16), np.float32)
    for dh in (0, 1):
        for dw in (0, 1):
            for eh in (0, 1):
                for ew in (0, 1):
                    col = 8 * dh + 4 * dw + 2 * eh + ew
                    for kh, ddh in _parity_terms(eh):
                        a = dh + ddh
                        dm, dhp = (0, a) if a < 2 else (1, 0)
                        for kw, ddw in _parity_terms(ew):
                            bb = dw + ddw
                            dn, dwp = (0, bb) if bb < 2 else (1, 0)
                            r0 = (2 * dhp + dwp) * cin
                            out[_SHIFT_IDX[(dm, dn)],
                                r0:r0 + cin, col] += v[:, kh, kw]
    return out


def pack_params(params, batch):
    """One-time repack of PyTorch-layout parameters into kernel layouts."""
    n_pos = H0 * W0
    fc_w = np.asarray(params["fc_w"], np.float32)              # (3136, latent)
    fc_b = np.asarray(params["fc_b"], np.float32)
    latent = fc_w.shape[1]

    # per-position fc weight (un-replicated): pfc[l, p, c] = fc_w[c*49 + p, l]
    pfc = fc_w.reshape(C0, n_pos, latent).transpose(2, 1, 0)   # (latent, 49, 64)
    bfc = fc_b.reshape(C0, n_pos).T                            # (49, 64)

    # (3, B*49, 1) boundary masks for the +1 / +7 / +8 row shifts
    m_idx, n_idx = np.divmod(np.arange(n_pos), W0)
    mask_n = (n_idx < W0 - 1).astype(np.float32)
    mask_m = (m_idx < H0 - 1).astype(np.float32)
    masks = np.stack([mask_n, mask_m, mask_n * mask_m])[:, :, None]   # (3,49,1)
    masks = np.tile(masks, (1, batch, 1))                             # (3,B*49,1)

    # K-concatenated phase weights: one matrix per transposed conv
    w1 = _pack_conv1(np.asarray(params["ct1_w"], np.float32))         # (4,64,128)
    w2 = _pack_conv2(np.asarray(params["ct2_w"], np.float32))         # (4,128,16)
    b1 = np.tile(np.asarray(params["ct1_b"], np.float32), 4)[None, :]       # (1,128)
    b2 = np.tile(np.asarray(params["ct2_b"], np.float32), PHASES)[None, :]  # (1,16)

    return {
        "masks": jnp.asarray(masks),
        "pfc": jnp.asarray(pfc, dtype=jnp.bfloat16),
        "bfc": jnp.asarray(bfc),
        "w1": jnp.asarray(w1.reshape(4 * C0, 4 * C1), dtype=jnp.bfloat16),
        "w2": jnp.asarray(w2.reshape(4 * 4 * C1, PHASES), dtype=jnp.bfloat16),
        "b1": jnp.asarray(b1),
        "b2": jnp.asarray(b2),
    }


# ------------------------------ decoder forward ------------------------------

def decoder_forward(packed, z):
    b = z.shape[0]
    out = _decoder_pallas(packed, z)                     # (B*49, 16) phase-packed
    # un-interleave phases: rows are (b, m, n), cols are (dh, dw, eh, ew);
    # pixel (4m + 2dh + eh, 4n + 2dw + ew)
    out = out.reshape(b, H0, W0, 2, 2, 2, 2)
    out = out.transpose(0, 1, 3, 5, 2, 4, 6)             # (b, m, dh, eh, n, dw, ew)
    return out.reshape(b, 1, 4 * H0, 4 * W0)             # NCHW (B, 1, 28, 28)


# --------------------------- params / reference ------------------------------

def init_params(key, latent_dim=LATENT_DIM):
    """Random parameters in PyTorch layouts (fc: (out,in); convT: (Cin,Cout,K,K))."""
    k = jax.random.split(key, 6)
    s = 0.05
    return {
        "fc_w": jax.random.normal(k[0], (C0 * H0 * W0, latent_dim), jnp.float32) * s,
        "fc_b": jax.random.normal(k[1], (C0 * H0 * W0,), jnp.float32) * s,
        "ct1_w": jax.random.normal(k[2], (C0, C1, KSIZE, KSIZE), jnp.float32) * s,
        "ct1_b": jax.random.normal(k[3], (C1,), jnp.float32) * s,
        "ct2_w": jax.random.normal(k[4], (C1, C2, KSIZE, KSIZE), jnp.float32) * s,
        "ct2_b": jax.random.normal(k[5], (C2,), jnp.float32) * s,
    }


def _conv_transpose_ref(x_nhwc, w, bias):
    # ConvTranspose2d(k=3, s=2, p=1, op=1) == dilated conv with flipped kernel.
    w_hwio = jnp.transpose(w[:, :, ::-1, ::-1], (2, 3, 0, 1))      # (K,K,Cin,Cout)
    out = jax.lax.conv_general_dilated(
        x_nhwc, w_hwio, window_strides=(1, 1),
        padding=((1, 2), (1, 2)),                                  # (K-1-p, K-1-p+op)
        lhs_dilation=(2, 2),
        dimension_numbers=("NHWC", "HWIO", "NHWC"))
    return out + bias


def decoder_reference(params, z):
    """Pure-JAX/XLA reference with PyTorch semantics (validation only)."""
    h = jnp.maximum(z @ params["fc_w"].T + params["fc_b"], 0.0)
    x = h.reshape(-1, C0, H0, W0).transpose(0, 2, 3, 1)
    x = jnp.maximum(_conv_transpose_ref(x, params["ct1_w"], params["ct1_b"]), 0.0)
    x = jax.nn.sigmoid(_conv_transpose_ref(x, params["ct2_w"], params["ct2_b"]))
    return x.transpose(0, 3, 1, 2)


if __name__ == "__main__":
    key = jax.random.PRNGKey(0)
    pkey, zkey = jax.random.split(key)
    params = init_params(pkey)
    packed = pack_params(params, BATCH)
    z = jax.random.normal(zkey, (BATCH, LATENT_DIM), jnp.float32)

    out = jax.jit(decoder_forward)(packed, z)
    jax.block_until_ready(out)

    assert out.shape == (BATCH, 1, 28, 28), out.shape
    assert bool(jnp.all(jnp.isfinite(out)))
    assert bool(jnp.all((out >= 0.0) & (out <= 1.0)))          # sigmoid range

    ref = decoder_reference(params, z)
    max_err = float(jnp.max(jnp.abs(out - ref)))
    assert max_err < 5e-3, max_err                             # bf16 dot inputs

    print("KERNEL_OK")
</pallas_src>

<mosaic_0001>
module attributes {stable_mosaic.version = 11 : i64} {
  func.func @_decoder_kernel(%arg0: memref<2x16xf32, #tpu.memory_space<smem>>, %arg1: memref<3x98x1xf32, #tpu.memory_space<vmem>>, %arg2: memref<16x49x64xbf16, #tpu.memory_space<vmem>>, %arg3: memref<49x64xf32, #tpu.memory_space<vmem>>, %arg4: memref<256x128xbf16, #tpu.memory_space<vmem>>, %arg5: memref<1x128xf32, #tpu.memory_space<vmem>>, %arg6: memref<512x16xbf16, #tpu.memory_space<vmem>>, %arg7: memref<1x16xf32, #tpu.memory_space<vmem>>, %arg8: memref<98x16xf32, #tpu.memory_space<vmem>>) attributes {dimension_semantics = [], scalar_prefetch = 0 : i64, scratch_operands = 0 : i64, tpu.core_type = #tpu.core_type<tc>} {
    %c0 = arith.constant 0 : index
    %c0_0 = arith.constant 0 : index
    %c0_1 = arith.constant 0 : index
    %0 = vector.load %arg1[%c0, %c0_0, %c0_1] : memref<3x98x1xf32, #tpu.memory_space<vmem>>, vector<1x98x1xf32>
    %1 = vector.shape_cast %0 : vector<1x98x1xf32> to vector<98x1xf32>
    %c1 = arith.constant 1 : index
    %c0_2 = arith.constant 0 : index
    %c0_3 = arith.constant 0 : index
    %2 = vector.load %arg1[%c1, %c0_2, %c0_3] : memref<3x98x1xf32, #tpu.memory_space<vmem>>, vector<1x98x1xf32>
    %3 = vector.shape_cast %2 : vector<1x98x1xf32> to vector<98x1xf32>
    %c2 = arith.constant 2 : index
    %c0_4 = arith.constant 0 : index
    %c0_5 = arith.constant 0 : index
    %4 = vector.load %arg1[%c2, %c0_4, %c0_5] : memref<3x98x1xf32, #tpu.memory_space<vmem>>, vector<1x98x1xf32>
    %5 = vector.shape_cast %4 : vector<1x98x1xf32> to vector<98x1xf32>
    %c0_6 = arith.constant 0 : index
    %c0_7 = arith.constant 0 : index
    %6 = vector.load %arg3[%c0_6, %c0_7] : memref<49x64xf32, #tpu.memory_space<vmem>>, vector<49x64xf32>
    %c0_8 = arith.constant 0 : index
    %c0_9 = arith.constant 0 : index
    %c0_10 = arith.constant 0 : index
    %7 = vector.load %arg2[%c0_8, %c0_9, %c0_10] : memref<16x49x64xbf16, #tpu.memory_space<vmem>>, vector<1x49x64xbf16>
    %8 = vector.shape_cast %7 : vector<1x49x64xbf16> to vector<49x64xbf16>
    %9 = arith.extf %8 : vector<49x64xbf16> to vector<49x64xf32>
    %c0_11 = arith.constant 0 : index
    %c0_12 = arith.constant 0 : index
    %10 = memref.load %arg0[%c0_11, %c0_12] : memref<2x16xf32, #tpu.memory_space<smem>>
    %11 = vector.broadcast %10 : f32 to vector<49x64xf32>
    %12 = arith.mulf %11, %9 : vector<49x64xf32>
    %13 = arith.addf %6, %12 : vector<49x64xf32>
    %c1_13 = arith.constant 1 : index
    %c0_14 = arith.constant 0 : index
    %14 = memref.load %arg0[%c1_13, %c0_14] : memref<2x16xf32, #tpu.memory_space<smem>>
    %15 = vector.broadcast %14 : f32 to vector<49x64xf32>
    %16 = arith.mulf %15, %9 : vector<49x64xf32>
    %17 = arith.addf %6, %16 : vector<49x64xf32>
    %c1_15 = arith.constant 1 : index
    %c0_16 = arith.constant 0 : index
    %c0_17 = arith.constant 0 : index
    %18 = vector.load %arg2[%c1_15, %c0_16, %c0_17] : memref<16x49x64xbf16, #tpu.memory_space<vmem>>, vector<1x49x64xbf16>
    %19 = vector.shape_cast %18 : vector<1x49x64xbf16> to vector<49x64xbf16>
    %20 = arith.extf %19 : vector<49x64xbf16> to vector<49x64xf32>
    %c0_18 = arith.constant 0 : index
    %c1_19 = arith.constant 1 : index
    %21 = memref.load %arg0[%c0_18, %c1_19] : memref<2x16xf32, #tpu.memory_space<smem>>
    %22 = vector.broadcast %21 : f32 to vector<49x64xf32>
    %23 = arith.mulf %22, %20 : vector<49x64xf32>
    %24 = arith.addf %13, %23 : vector<49x64xf32>
    %c1_20 = arith.constant 1 : index
    %c1_21 = arith.constant 1 : index
    %25 = memref.load %arg0[%c1_20, %c1_21] : memref<2x16xf32, #tpu.memory_space<smem>>
    %26 = vector.broadcast %25 : f32 to vector<49x64xf32>
    %27 = arith.mulf %26, %20 : vector<49x64xf32>
    %28 = arith.addf %17, %27 : vector<49x64xf32>
    %c2_22 = arith.constant 2 : index
    %c0_23 = arith.constant 0 : index
    %c0_24 = arith.constant 0 : index
    %29 = vector.load %arg2[%c2_22, %c0_23, %c0_24] : memref<16x49x64xbf16, #tpu.memory_space<vmem>>, vector<1x49x64xbf16>
    %30 = vector.shape_cast %29 : vector<1x49x64xbf16> to vector<49x64xbf16>
    %31 = arith.extf %30 : vector<49x64xbf16> to vector<49x64xf32>
    %c0_25 = arith.constant 0 : index
    %c2_26 = arith.constant 2 : index
    %32 = memref.load %arg0[%c0_25, %c2_26] : memref<2x16xf32, #tpu.memory_space<smem>>
    %33 = vector.broadcast %32 : f32 to vector<49x64xf32>
    %34 = arith.mulf %33, %31 : vector<49x64xf32>
    %35 = arith.addf %24, %34 : vector<49x64xf32>
    %c1_27 = arith.constant 1 : index
    %c2_28 = arith.constant 2 : index
    %36 = memref.load %arg0[%c1_27, %c2_28] : memref<2x16xf32, #tpu.memory_space<smem>>
    %37 = vector.broadcast %36 : f32 to vector<49x64xf32>
    %38 = arith.mulf %37, %31 : vector<49x64xf32>
    %39 = arith.addf %28, %38 : vector<49x64xf32>
    %c3 = arith.constant 3 : index
    %c0_29 = arith.constant 0 : index
    %c0_30 = arith.constant 0 : index
    %40 = vector.load %arg2[%c3, %c0_29, %c0_30] : memref<16x49x64xbf16, #tpu.memory_space<vmem>>, vector<1x49x64xbf16>
    %41 = vector.shape_cast %40 : vector<1x49x64xbf16> to vector<49x64xbf16>
    %42 = arith.extf %41 : vector<49x64xbf16> to vector<49x64xf32>
    %c0_31 = arith.constant 0 : index
    %c3_32 = arith.constant 3 : index
    %43 = memref.load %arg0[%c0_31, %c3_32] : memref<2x16xf32, #tpu.memory_space<smem>>
    %44 = vector.broadcast %43 : f32 to vector<49x64xf32>
    %45 = arith.mulf %44, %42 : vector<49x64xf32>
    %46 = arith.addf %35, %45 : vector<49x64xf32>
    %c1_33 = arith.constant 1 : index
    %c3_34 = arith.constant 3 : index
    %47 = memref.load %arg0[%c1_33, %c3_34] : memref<2x16xf32, #tpu.memory_space<smem>>
    %48 = vector.broadcast %47 : f32 to vector<49x64xf32>
    %49 = arith.mulf %48, %42 : vector<49x64xf32>
    %50 = arith.addf %39, %49 : vector<49x64xf32>
    %c4 = arith.constant 4 : index
    %c0_35 = arith.constant 0 : index
    %c0_36 = arith.constant 0 : index
    %51 = vector.load %arg2[%c4, %c0_35, %c0_36] : memref<16x49x64xbf16, #tpu.memory_space<vmem>>, vector<1x49x64xbf16>
    %52 = vector.shape_cast %51 : vector<1x49x64xbf16> to vector<49x64xbf16>
    %53 = arith.extf %52 : vector<49x64xbf16> to vector<49x64xf32>
    %c0_37 = arith.constant 0 : index
    %c4_38 = arith.constant 4 : index
    %54 = memref.load %arg0[%c0_37, %c4_38] : memref<2x16xf32, #tpu.memory_space<smem>>
    %55 = vector.broadcast %54 : f32 to vector<49x64xf32>
    %56 = arith.mulf %55, %53 : vector<49x64xf32>
    %57 = arith.addf %46, %56 : vector<49x64xf32>
    %c1_39 = arith.constant 1 : index
    %c4_40 = arith.constant 4 : index
    %58 = memref.load %arg0[%c1_39, %c4_40] : memref<2x16xf32, #tpu.memory_space<smem>>
    %59 = vector.broadcast %58 : f32 to vector<49x64xf32>
    %60 = arith.mulf %59, %53 : vector<49x64xf32>
    %61 = arith.addf %50, %60 : vector<49x64xf32>
    %c5 = arith.constant 5 : index
    %c0_41 = arith.constant 0 : index
    %c0_42 = arith.constant 0 : index
    %62 = vector.load %arg2[%c5, %c0_41, %c0_42] : memref<16x49x64xbf16, #tpu.memory_space<vmem>>, vector<1x49x64xbf16>
    %63 = vector.shape_cast %62 : vector<1x49x64xbf16> to vector<49x64xbf16>
    %64 = arith.extf %63 : vector<49x64xbf16> to vector<49x64xf32>
    %c0_43 = arith.constant 0 : index
    %c5_44 = arith.constant 5 : index
    %65 = memref.load %arg0[%c0_43, %c5_44] : memref<2x16xf32, #tpu.memory_space<smem>>
    %66 = vector.broadcast %65 : f32 to vector<49x64xf32>
    %67 = arith.mulf %66, %64 : vector<49x64xf32>
    %68 = arith.addf %57, %67 : vector<49x64xf32>
    %c1_45 = arith.constant 1 : index
    %c5_46 = arith.constant 5 : index
    %69 = memref.load %arg0[%c1_45, %c5_46] : memref<2x16xf32, #tpu.memory_space<smem>>
    %70 = vector.broadcast %69 : f32 to vector<49x64xf32>
    %71 = arith.mulf %70, %64 : vector<49x64xf32>
    %72 = arith.addf %61, %71 : vector<49x64xf32>
    %c6 = arith.constant 6 : index
    %c0_47 = arith.constant 0 : index
    %c0_48 = arith.constant 0 : index
    %73 = vector.load %arg2[%c6, %c0_47, %c0_48] : memref<16x49x64xbf16, #tpu.memory_space<vmem>>, vector<1x49x64xbf16>
    %74 = vector.shape_cast %73 : vector<1x49x64xbf16> to vector<49x64xbf16>
    %75 = arith.extf %74 : vector<49x64xbf16> to vector<49x64xf32>
    %c0_49 = arith.constant 0 : index
    %c6_50 = arith.constant 6 : index
    %76 = memref.load %arg0[%c0_49, %c6_50] : memref<2x16xf32, #tpu.memory_space<smem>>
    %77 = vector.broadcast %76 : f32 to vector<49x64xf32>
    %78 = arith.mulf %77, %75 : vector<49x64xf32>
    %79 = arith.addf %68, %78 : vector<49x64xf32>
    %c1_51 = arith.constant 1 : index
    %c6_52 = arith.constant 6 : index
    %80 = memref.load %arg0[%c1_51, %c6_52] : memref<2x16xf32, #tpu.memory_space<smem>>
    %81 = vector.broadcast %80 : f32 to vector<49x64xf32>
    %82 = arith.mulf %81, %75 : vector<49x64xf32>
    %83 = arith.addf %72, %82 : vector<49x64xf32>
    %c7 = arith.constant 7 : index
    %c0_53 = arith.constant 0 : index
    %c0_54 = arith.constant 0 : index
    %84 = vector.load %arg2[%c7, %c0_53, %c0_54] : memref<16x49x64xbf16, #tpu.memory_space<vmem>>, vector<1x49x64xbf16>
    %85 = vector.shape_cast %84 : vector<1x49x64xbf16> to vector<49x64xbf16>
    %86 = arith.extf %85 : vector<49x64xbf16> to vector<49x64xf32>
    %c0_55 = arith.constant 0 : index
    %c7_56 = arith.constant 7 : index
    %87 = memref.load %arg0[%c0_55, %c7_56] : memref<2x16xf32, #tpu.memory_space<smem>>
    %88 = vector.broadcast %87 : f32 to vector<49x64xf32>
    %89 = arith.mulf %88, %86 : vector<49x64xf32>
    %90 = arith.addf %79, %89 : vector<49x64xf32>
    %c1_57 = arith.constant 1 : index
    %c7_58 = arith.constant 7 : index
    %91 = memref.load %arg0[%c1_57, %c7_58] : memref<2x16xf32, #tpu.memory_space<smem>>
    %92 = vector.broadcast %91 : f32 to vector<49x64xf32>
    %93 = arith.mulf %92, %86 : vector<49x64xf32>
    %94 = arith.addf %83, %93 : vector<49x64xf32>
    %c8 = arith.constant 8 : index
    %c0_59 = arith.constant 0 : index
    %c0_60 = arith.constant 0 : index
    %95 = vector.load %arg2[%c8, %c0_59, %c0_60] : memref<16x49x64xbf16, #tpu.memory_space<vmem>>, vector<1x49x64xbf16>
    %96 = vector.shape_cast %95 : vector<1x49x64xbf16> to vector<49x64xbf16>
    %97 = arith.extf %96 : vector<49x64xbf16> to vector<49x64xf32>
    %c0_61 = arith.constant 0 : index
    %c8_62 = arith.constant 8 : index
    %98 = memref.load %arg0[%c0_61, %c8_62] : memref<2x16xf32, #tpu.memory_space<smem>>
    %99 = vector.broadcast %98 : f32 to vector<49x64xf32>
    %100 = arith.mulf %99, %97 : vector<49x64xf32>
    %101 = arith.addf %90, %100 : vector<49x64xf32>
    %c1_63 = arith.constant 1 : index
    %c8_64 = arith.constant 8 : index
    %102 = memref.load %arg0[%c1_63, %c8_64] : memref<2x16xf32, #tpu.memory_space<smem>>
    %103 = vector.broadcast %102 : f32 to vector<49x64xf32>
    %104 = arith.mulf %103, %97 : vector<49x64xf32>
    %105 = arith.addf %94, %104 : vector<49x64xf32>
    %c9 = arith.constant 9 : index
    %c0_65 = arith.constant 0 : index
    %c0_66 = arith.constant 0 : index
    %106 = vector.load %arg2[%c9, %c0_65, %c0_66] : memref<16x49x64xbf16, #tpu.memory_space<vmem>>, vector<1x49x64xbf16>
    %107 = vector.shape_cast %106 : vector<1x49x64xbf16> to vector<49x64xbf16>
    %108 = arith.extf %107 : vector<49x64xbf16> to vector<49x64xf32>
    %c0_67 = arith.constant 0 : index
    %c9_68 = arith.constant 9 : index
    %109 = memref.load %arg0[%c0_67, %c9_68] : memref<2x16xf32, #tpu.memory_space<smem>>
    %110 = vector.broadcast %109 : f32 to vector<49x64xf32>
    %111 = arith.mulf %110, %108 : vector<49x64xf32>
    %112 = arith.addf %101, %111 : vector<49x64xf32>
    %c1_69 = arith.constant 1 : index
    %c9_70 = arith.constant 9 : index
    %113 = memref.load %arg0[%c1_69, %c9_70] : memref<2x16xf32, #tpu.memory_space<smem>>
    %114 = vector.broadcast %113 : f32 to vector<49x64xf32>
    %115 = arith.mulf %114, %108 : vector<49x64xf32>
    %116 = arith.addf %105, %115 : vector<49x64xf32>
    %c10 = arith.constant 10 : index
    %c0_71 = arith.constant 0 : index
    %c0_72 = arith.constant 0 : index
    %117 = vector.load %arg2[%c10, %c0_71, %c0_72] : memref<16x49x64xbf16, #tpu.memory_space<vmem>>, vector<1x49x64xbf16>
    %118 = vector.shape_cast %117 : vector<1x49x64xbf16> to vector<49x64xbf16>
    %119 = arith.extf %118 : vector<49x64xbf16> to vector<49x64xf32>
    %c0_73 = arith.constant 0 : index
    %c10_74 = arith.constant 10 : index
    %120 = memref.load %arg0[%c0_73, %c10_74] : memref<2x16xf32, #tpu.memory_space<smem>>
    %121 = vector.broadcast %120 : f32 to vector<49x64xf32>
    %122 = arith.mulf %121, %119 : vector<49x64xf32>
    %123 = arith.addf %112, %122 : vector<49x64xf32>
    %c1_75 = arith.constant 1 : index
    %c10_76 = arith.constant 10 : index
    %124 = memref.load %arg0[%c1_75, %c10_76] : memref<2x16xf32, #tpu.memory_space<smem>>
    %125 = vector.broadcast %124 : f32 to vector<49x64xf32>
    %126 = arith.mulf %125, %119 : vector<49x64xf32>
    %127 = arith.addf %116, %126 : vector<49x64xf32>
    %c11 = arith.constant 11 : index
    %c0_77 = arith.constant 0 : index
    %c0_78 = arith.constant 0 : index
    %128 = vector.load %arg2[%c11, %c0_77, %c0_78] : memref<16x49x64xbf16, #tpu.memory_space<vmem>>, vector<1x49x64xbf16>
    %129 = vector.shape_cast %128 : vector<1x49x64xbf16> to vector<49x64xbf16>
    %130 = arith.extf %129 : vector<49x64xbf16> to vector<49x64xf32>
    %c0_79 = arith.constant 0 : index
    %c11_80 = arith.constant 11 : index
    %131 = memref.load %arg0[%c0_79, %c11_80] : memref<2x16xf32, #tpu.memory_space<smem>>
    %132 = vector.broadcast %131 : f32 to vector<49x64xf32>
    %133 = arith.mulf %132, %130 : vector<49x64xf32>
    %134 = arith.addf %123, %133 : vector<49x64xf32>
    %c1_81 = arith.constant 1 : index
    %c11_82 = arith.constant 11 : index
    %135 = memref.load %arg0[%c1_81, %c11_82] : memref<2x16xf32, #tpu.memory_space<smem>>
    %136 = vector.broadcast %135 : f32 to vector<49x64xf32>
    %137 = arith.mulf %136, %130 : vector<49x64xf32>
    %138 = arith.addf %127, %137 : vector<49x64xf32>
    %c12 = arith.constant 12 : index
    %c0_83 = arith.constant 0 : index
    %c0_84 = arith.constant 0 : index
    %139 = vector.load %arg2[%c12, %c0_83, %c0_84] : memref<16x49x64xbf16, #tpu.memory_space<vmem>>, vector<1x49x64xbf16>
    %140 = vector.shape_cast %139 : vector<1x49x64xbf16> to vector<49x64xbf16>
    %141 = arith.extf %140 : vector<49x64xbf16> to vector<49x64xf32>
    %c0_85 = arith.constant 0 : index
    %c12_86 = arith.constant 12 : index
    %142 = memref.load %arg0[%c0_85, %c12_86] : memref<2x16xf32, #tpu.memory_space<smem>>
    %143 = vector.broadcast %142 : f32 to vector<49x64xf32>
    %144 = arith.mulf %143, %141 : vector<49x64xf32>
    %145 = arith.addf %134, %144 : vector<49x64xf32>
    %c1_87 = arith.constant 1 : index
    %c12_88 = arith.constant 12 : index
    %146 = memref.load %arg0[%c1_87, %c12_88] : memref<2x16xf32, #tpu.memory_space<smem>>
    %147 = vector.broadcast %146 : f32 to vector<49x64xf32>
    %148 = arith.mulf %147, %141 : vector<49x64xf32>
    %149 = arith.addf %138, %148 : vector<49x64xf32>
    %c13 = arith.constant 13 : index
    %c0_89 = arith.constant 0 : index
    %c0_90 = arith.constant 0 : index
    %150 = vector.load %arg2[%c13, %c0_89, %c0_90] : memref<16x49x64xbf16, #tpu.memory_space<vmem>>, vector<1x49x64xbf16>
    %151 = vector.shape_cast %150 : vector<1x49x64xbf16> to vector<49x64xbf16>
    %152 = arith.extf %151 : vector<49x64xbf16> to vector<49x64xf32>
    %c0_91 = arith.constant 0 : index
    %c13_92 = arith.constant 13 : index
    %153 = memref.load %arg0[%c0_91, %c13_92] : memref<2x16xf32, #tpu.memory_space<smem>>
    %154 = vector.broadcast %153 : f32 to vector<49x64xf32>
    %155 = arith.mulf %154, %152 : vector<49x64xf32>
    %156 = arith.addf %145, %155 : vector<49x64xf32>
    %c1_93 = arith.constant 1 : index
    %c13_94 = arith.constant 13 : index
    %157 = memref.load %arg0[%c1_93, %c13_94] : memref<2x16xf32, #tpu.memory_space<smem>>
    %158 = vector.broadcast %157 : f32 to vector<49x64xf32>
    %159 = arith.mulf %158, %152 : vector<49x64xf32>
    %160 = arith.addf %149, %159 : vector<49x64xf32>
    %c14 = arith.constant 14 : index
    %c0_95 = arith.constant 0 : index
    %c0_96 = arith.constant 0 : index
    %161 = vector.load %arg2[%c14, %c0_95, %c0_96] : memref<16x49x64xbf16, #tpu.memory_space<vmem>>, vector<1x49x64xbf16>
    %162 = vector.shape_cast %161 : vector<1x49x64xbf16> to vector<49x64xbf16>
    %163 = arith.extf %162 : vector<49x64xbf16> to vector<49x64xf32>
    %c0_97 = arith.constant 0 : index
    %c14_98 = arith.constant 14 : index
    %164 = memref.load %arg0[%c0_97, %c14_98] : memref<2x16xf32, #tpu.memory_space<smem>>
    %165 = vector.broadcast %164 : f32 to vector<49x64xf32>
    %166 = arith.mulf %165, %163 : vector<49x64xf32>
    %167 = arith.addf %156, %166 : vector<49x64xf32>
    %c1_99 = arith.constant 1 : index
    %c14_100 = arith.constant 14 : index
    %168 = memref.load %arg0[%c1_99, %c14_100] : memref<2x16xf32, #tpu.memory_space<smem>>
    %169 = vector.broadcast %168 : f32 to vector<49x64xf32>
    %170 = arith.mulf %169, %163 : vector<49x64xf32>
    %171 = arith.addf %160, %170 : vector<49x64xf32>
    %c15 = arith.constant 15 : index
    %c0_101 = arith.constant 0 : index
    %c0_102 = arith.constant 0 : index
    %172 = vector.load %arg2[%c15, %c0_101, %c0_102] : memref<16x49x64xbf16, #tpu.memory_space<vmem>>, vector<1x49x64xbf16>
    %173 = vector.shape_cast %172 : vector<1x49x64xbf16> to vector<49x64xbf16>
    %174 = arith.extf %173 : vector<49x64xbf16> to vector<49x64xf32>
    %c0_103 = arith.constant 0 : index
    %c15_104 = arith.constant 15 : index
    %175 = memref.load %arg0[%c0_103, %c15_104] : memref<2x16xf32, #tpu.memory_space<smem>>
    %176 = vector.broadcast %175 : f32 to vector<49x64xf32>
    %177 = arith.mulf %176, %174 : vector<49x64xf32>
    %178 = arith.addf %167, %177 : vector<49x64xf32>
    %c1_105 = arith.constant 1 : index
    %c15_106 = arith.constant 15 : index
    %179 = memref.load %arg0[%c1_105, %c15_106] : memref<2x16xf32, #tpu.memory_space<smem>>
    %180 = vector.broadcast %179 : f32 to vector<49x64xf32>
    %181 = arith.mulf %180, %174 : vector<49x64xf32>
    %182 = arith.addf %171, %181 : vector<49x64xf32>
    %183 = tpu.concatenate %178, %182 in 0 : vector<49x64xf32>, vector<49x64xf32> -> vector<98x64xf32>
    %cst = arith.constant 0.000000e+00 : f32
    %184 = vector.broadcast %cst : f32 to vector<98x64xf32>
    %185 = arith.maximumf %183, %184 : vector<98x64xf32>
    %cst_107 = arith.constant 0.000000e+00 : f32
    %186 = vector.broadcast %cst_107 : f32 to vector<8x64xf32>
    %187 = tpu.concatenate %185, %186 in 0 : vector<98x64xf32>, vector<8x64xf32> -> vector<106x64xf32>
    %188 = vector.extract_strided_slice %187 {offsets = [1, 0], sizes = [98, 64], strides = [1, 1]} : vector<106x64xf32> to vector<98x64xf32>
    %189 = vector.broadcast %1 : vector<98x1xf32> to vector<98x64xf32>
    %190 = arith.mulf %188, %189 : vector<98x64xf32>
    %191 = vector.extract_strided_slice %187 {offsets = [7, 0], sizes = [98, 64], strides = [1, 1]} : vector<106x64xf32> to vector<98x64xf32>
    %192 = vector.broadcast %3 : vector<98x1xf32> to vector<98x64xf32>
    %193 = arith.mulf %191, %192 : vector<98x64xf32>
    %194 = vector.extract_strided_slice %187 {offsets = [8, 0], sizes = [98, 64], strides = [1, 1]} : vector<106x64xf32> to vector<98x64xf32>
    %195 = vector.broadcast %5 : vector<98x1xf32> to vector<98x64xf32>
    %196 = arith.mulf %194, %195 : vector<98x64xf32>
    %197 = tpu.concatenate %185, %190, %193, %196 in 1 : vector<98x64xf32>, vector<98x64xf32>, vector<98x64xf32>, vector<98x64xf32> -> vector<98x256xf32>
    %198 = arith.truncf %197 : vector<98x256xf32> to vector<98x256xbf16>
    %c0_108 = arith.constant 0 : index
    %c0_109 = arith.constant 0 : index
    %199 = vector.load %arg4[%c0_108, %c0_109] : memref<256x128xbf16, #tpu.memory_space<vmem>>, vector<256x128xbf16>
    %cst_110 = arith.constant dense<0.000000e+00> : vector<98x128xf32>
    %200 = tpu.matmul %198, %199, %cst_110 {dimension_numbers = #tpu.dot_dimension_numbers<[1], [0], [0], [1], [0, 0, 1, 1], [], []>} : vector<98x256xbf16>, vector<256x128xbf16>, vector<98x128xf32> -> vector<98x128xf32>
    %c0_111 = arith.constant 0 : index
    %c0_112 = arith.constant 0 : index
    %201 = vector.load %arg5[%c0_111, %c0_112] : memref<1x128xf32, #tpu.memory_space<vmem>>, vector<1x128xf32>
    %202 = vector.broadcast %201 : vector<1x128xf32> to vector<98x128xf32>
    %203 = arith.addf %200, %202 : vector<98x128xf32>
    %cst_113 = arith.constant 0.000000e+00 : f32
    %204 = vector.broadcast %cst_113 : f32 to vector<98x128xf32>
    %205 = arith.maximumf %203, %204 : vector<98x128xf32>
    %cst_114 = arith.constant 0.000000e+00 : f32
    %206 = vector.broadcast %cst_114 : f32 to vector<8x128xf32>
    %207 = tpu.concatenate %205, %206 in 0 : vector<98x128xf32>, vector<8x128xf32> -> vector<106x128xf32>
    %208 = vector.extract_strided_slice %207 {offsets = [1, 0], sizes = [98, 128], strides = [1, 1]} : vector<106x128xf32> to vector<98x128xf32>
    %209 = vector.broadcast %1 : vector<98x1xf32> to vector<98x128xf32>
    %210 = arith.mulf %208, %209 : vector<98x128xf32>
    %211 = vector.extract_strided_slice %207 {offsets = [7, 0], sizes = [98, 128], strides = [1, 1]} : vector<106x128xf32> to vector<98x128xf32>
    %212 = vector.broadcast %3 : vector<98x1xf32> to vector<98x128xf32>
    %213 = arith.mulf %211, %212 : vector<98x128xf32>
    %214 = vector.extract_strided_slice %207 {offsets = [8, 0], sizes = [98, 128], strides = [1, 1]} : vector<106x128xf32> to vector<98x128xf32>
    %215 = vector.broadcast %5 : vector<98x1xf32> to vector<98x128xf32>
    %216 = arith.mulf %214, %215 : vector<98x128xf32>
    %217 = tpu.concatenate %205, %210, %213, %216 in 1 : vector<98x128xf32>, vector<98x128xf32>, vector<98x128xf32>, vector<98x128xf32> -> vector<98x512xf32>
    %218 = arith.truncf %217 : vector<98x512xf32> to vector<98x512xbf16>
    %c0_115 = arith.constant 0 : index
    %c0_116 = arith.constant 0 : index
    %219 = vector.load %arg6[%c0_115, %c0_116] : memref<512x16xbf16, #tpu.memory_space<vmem>>, vector<512x16xbf16>
    %cst_117 = arith.constant dense<0.000000e+00> : vector<98x16xf32>
    %220 = tpu.matmul %218, %219, %cst_117 {dimension_numbers = #tpu.dot_dimension_numbers<[1], [0], [0], [1], [0, 0, 1, 1], [], []>} : vector<98x512xbf16>, vector<512x16xbf16>, vector<98x16xf32> -> vector<98x16xf32>
    %c0_118 = arith.constant 0 : index
    %c0_119 = arith.constant 0 : index
    %221 = vector.load %arg7[%c0_118, %c0_119] : memref<1x16xf32, #tpu.memory_space<vmem>>, vector<1x16xf32>
    %222 = vector.broadcast %221 : vector<1x16xf32> to vector<98x16xf32>
    %223 = arith.addf %220, %222 : vector<98x16xf32>
    %224 = arith.negf %223 : vector<98x16xf32>
    %225 = math.exp %224 : vector<98x16xf32>
    %cst_120 = arith.constant 1.000000e+00 : f32
    %226 = vector.broadcast %cst_120 : f32 to vector<98x16xf32>
    %227 = arith.addf %226, %225 : vector<98x16xf32>
    %228 = arith.divf %226, %227 : vector<98x16xf32>
    %c0_121 = arith.constant 0 : index
    %c0_122 = arith.constant 0 : index
    %229 = vector.load %arg8[%c0_121, %c0_122] : memref<98x16xf32, #tpu.memory_space<vmem>>, vector<98x16xf32>
    tpu.vector_store %arg8[%c0_121, %c0_122], %228 {strides = array<i32>} : memref<98x16xf32, #tpu.memory_space<vmem>>, vector<98x16xf32>,
    return
  }
}

</mosaic_0001>

<llo_original>
// kernel: decoder_forward.1
$region0: #{decoder_forward.1}
  #allocation0 [shape = 'u32[]', space=smem, size = 0x4, offset = 0x4, fixed_abs, tag = 'smem constant byte address 0x4 - core index']
  #allocation1 [shape = 'u32[144,128]{1,0:T(1,128)}', space=vmem, size = 0x12000, scoped, tag = 'internal scratch']
  %s0 = inlined_call_operand.vmem [shape: f32[2,16], index: 0, kind: input, shape index: {}]
  %s1 = inlined_call_operand.vmem [shape: f32[3,98,1], index: 1, kind: input, shape index: {}]
  %s2 = inlined_call_operand.vmem [shape: bf16[16,49,64], index: 2, kind: input, shape index: {}]
  %s3 = inlined_call_operand.vmem [shape: f32[49,64], index: 3, kind: input, shape index: {}]
  %s4 = inlined_call_operand.vmem [shape: bf16[256,128], index: 4, kind: input, shape index: {}]
  %s5 = inlined_call_operand.vmem [shape: f32[1,128], index: 5, kind: input, shape index: {}]
  %s6 = inlined_call_operand.vmem [shape: bf16[512,16], index: 6, kind: input, shape index: {}]
  %s7 = inlined_call_operand.vmem [shape: f32[1,16], index: 7, kind: input, shape index: {}]
  %s8 = inlined_call_operand.vmem [shape: f32[98,16], index: 8, kind: output, shape index: {}]
  %s9 = sld [smem:[#allocation0]]
  $region46: #{decoder_forward.1} parent=0
    _
  %s11 = ssub.s32 1, %s9
  %s12 = scalar_select 0, %s11, %s9
  $region1: #{decoder_forward.1} parent=0
    #allocation2 [shape = 'u8[1024]{0}', space=smem, size = 0x400, scoped, tag = 'input window, operand 0, single buffered']
    #allocation3 [shape = 's32[1]{0}', space=sflag, size = 0x4, scoped, tag = 'scoped memory for decoder_forward.1']
    %13 = vsyncpa [#allocation3], 0
    // Predicated region
    $region2: #{decoder_forward.1} parent=1 // pred_check
      _
    $region3: #{decoder_forward.1} parent=1 // pred_check_branch
      %15 = sbr.rel (0) target = $region5
    $region4: #{decoder_forward.1} parent=1 // pred_region
      %s17 = ssub.s32 32, 32
      %18 = vsyncadd [#allocation3], %s17
      %s20 = sshll.u32 %s0, 4
      %s21 = int_to_ptr.vmem [resolvable:$true] %s20
      %23 = dma.vmem_to_smem %s21, 32, [#allocation2], [#allocation3]
    $region5: #{decoder_forward.1} parent=1 // pred_fallthru
      _
    // Predicated region
    $region6: #{decoder_forward.1} parent=1 // pred_check
      _
    $region7: #{decoder_forward.1} parent=1 // pred_check_branch
      %25 = sbr.rel (0) target = $region9
    $region8: #{decoder_forward.1} parent=1 // pred_region
      _
    $region9: #{decoder_forward.1} parent=1 // pred_fallthru
      _
    // Predicated region
    $region10: #{decoder_forward.1} parent=1 // pred_check
      _
    $region11: #{decoder_forward.1} parent=1 // pred_check_branch
      %27 = sbr.rel (0) target = $region13
    $region12: #{decoder_forward.1} parent=1 // pred_region
      _
    $region13: #{decoder_forward.1} parent=1 // pred_fallthru
      _
    // Predicated region
    $region14: #{decoder_forward.1} parent=1 // pred_check
      _
    $region15: #{decoder_forward.1} parent=1 // pred_check_branch
      %29 = sbr.rel (0) target = $region17
    $region16: #{decoder_forward.1} parent=1 // pred_region
      _
    $region17: #{decoder_forward.1} parent=1 // pred_fallthru
      _
    // Predicated region
    $region18: #{decoder_forward.1} parent=1 // pred_check
      _
    $region19: #{decoder_forward.1} parent=1 // pred_check_branch
      %31 = sbr.rel (0) target = $region21
    $region20: #{decoder_forward.1} parent=1 // pred_region
      _
    $region21: #{decoder_forward.1} parent=1 // pred_fallthru
      _
    // Predicated region
    $region22: #{decoder_forward.1} parent=1 // pred_check
      _
    $region23: #{decoder_forward.1} parent=1 // pred_check_branch
      %33 = sbr.rel (0) target = $region25
    $region24: #{decoder_forward.1} parent=1 // pred_region
      _
    $region25: #{decoder_forward.1} parent=1 // pred_fallthru
      _
    // Predicated region
    $region26: #{decoder_forward.1} parent=1 // pred_check
      _
    $region27: #{decoder_forward.1} parent=1 // pred_check_branch
      %35 = sbr.rel (0) target = $region29
    $region28: #{decoder_forward.1} parent=1 // pred_region
      _
    $region29: #{decoder_forward.1} parent=1 // pred_fallthru
      _
    // Predicated region
    $region30: #{decoder_forward.1} parent=1 // pred_check
      _
    $region31: #{decoder_forward.1} parent=1 // pred_check_branch
      %37 = sbr.rel (0) target = $region33
    $region32: #{decoder_forward.1} parent=1 // pred_region
      _
    $region33: #{decoder_forward.1} parent=1 // pred_fallthru
      _
    // Predicated region
    $region34: #{decoder_forward.1} parent=1 // pred_check
      _
    $region35: #{decoder_forward.1} parent=1 // pred_check_branch
      %39 = sbr.rel (0) target = $region37
    $region36: #{decoder_forward.1} parent=1 // pred_region
      %40 = dma.done [#allocation3], 32
    $region37: #{decoder_forward.1} parent=1 // pred_fallthru
      _
    %41 = sfence
    %v43 = vld [vmem:[%s1] sm:$0xff]
    %v44 = vld [vmem:[%s1 + $0x8] sm:$0xff]
    %v45 = vld [vmem:[%s1 + $0x10] sm:$0xff]
    %v46 = vld [vmem:[%s1 + $0x18] sm:$0xff]
    %v47 = vld [vmem:[%s1 + $0x20] sm:$0xff]
    %v48 = vld [vmem:[%s1 + $0x28] sm:$0xff]
    %v49 = vld [vmem:[%s1 + $0x30] sm:$0xff]
    %v50 = vld [vmem:[%s1 + $0x38] sm:$0xff]
    %v51 = vld [vmem:[%s1 + $0x40] sm:$0xff]
    %v52 = vld [vmem:[%s1 + $0x48] sm:$0xff]
    %v53 = vld [vmem:[%s1 + $0x50] sm:$0xff]
    %v54 = vld [vmem:[%s1 + $0x58] sm:$0xff]
    %v55 = vld [vmem:[%s1 + $0x60] sm:$0x3]
    %s56 = scalar_lea.vmem %s1, 104
    %v57 = vld [vmem:[%s56] sm:$0xff]
    %v58 = vld [vmem:[%s56 + $0x8] sm:$0xff]
    %v59 = vld [vmem:[%s56 + $0x10] sm:$0xff]
    %v60 = vld [vmem:[%s56 + $0x18] sm:$0xff]
    %v61 = vld [vmem:[%s56 + $0x20] sm:$0xff]
    %v62 = vld [vmem:[%s56 + $0x28] sm:$0xff]
    %v63 = vld [vmem:[%s56 + $0x30] sm:$0xff]
    %v64 = vld [vmem:[%s56 + $0x38] sm:$0xff]
    %v65 = vld [vmem:[%s56 + $0x40] sm:$0xff]
    %v66 = vld [vmem:[%s56 + $0x48] sm:$0xff]
    %v67 = vld [vmem:[%s56 + $0x50] sm:$0xff]
    %v68 = vld [vmem:[%s56 + $0x58] sm:$0xff]
    %v69 = vld [vmem:[%s56 + $0x60] sm:$0x3]
    %s70 = scalar_lea.vmem %s1, 208
    %v71 = vld [vmem:[%s70] sm:$0xff]
    %v72 = vld [vmem:[%s70 + $0x8] sm:$0xff]
    %v73 = vld [vmem:[%s70 + $0x10] sm:$0xff]
    %v74 = vld [vmem:[%s70 + $0x18] sm:$0xff]
    %v75 = vld [vmem:[%s70 + $0x20] sm:$0xff]
    %v76 = vld [vmem:[%s70 + $0x28] sm:$0xff]
    %v77 = vld [vmem:[%s70 + $0x30] sm:$0xff]
    %v78 = vld [vmem:[%s70 + $0x38] sm:$0xff]
    %v79 = vld [vmem:[%s70 + $0x40] sm:$0xff]
    %v80 = vld [vmem:[%s70 + $0x48] sm:$0xff]
    %v81 = vld [vmem:[%s70 + $0x50] sm:$0xff]
    %v82 = vld [vmem:[%s70 + $0x58] sm:$0xff]
    %v83 = vld [vmem:[%s70 + $0x60] sm:$0x3]
    %v84 = vld [vmem:[%s3] sm:$0xff]
    %v85 = vld [vmem:[%s3 + $0x8] sm:$0xff]
    %v86 = vld [vmem:[%s3 + $0x10] sm:$0xff]
    %v87 = vld [vmem:[%s3 + $0x18] sm:$0xff]
    %v88 = vld [vmem:[%s3 + $0x20] sm:$0xff]
    %v89 = vld [vmem:[%s3 + $0x28] sm:$0xff]
    %v90 = vld [vmem:[%s3 + $0x30] sm:$0x1]
    %v91 = vld [vmem:[%s2] sm:$0xf]
    %v92 = vld [vmem:[%s2 + $0x4] sm:$0xf]
    %v93 = vld [vmem:[%s2 + $0x8] sm:$0xf]
    %v94 = vld [vmem:[%s2 + $0xc] sm:$0xf]
    %v95 = vld [vmem:[%s2 + $0x10] sm:$0xf]
    %v96 = vld [vmem:[%s2 + $0x14] sm:$0xf]
    %v97 = vld [vmem:[%s2 + $0x18] sm:$0x1]
    %v98 = vunpack.c.l.bf16 %v91
    %v99 = vunpack.c.l.bf16 %v92
    %v100 = vunpack.c.l.bf16 %v93
    %v101 = vunpack.c.l.bf16 %v94
    %v102 = vunpack.c.l.bf16 %v95
    %v103 = vunpack.c.l.bf16 %v96
    %v104 = vunpack.c.l.bf16 %v97
    %s105 = sld [smem:[#allocation2]]
    %v106 = vstv %s105
    %v107 = vmul.f32 %v106, %v98
    %v108 = vmul.f32 %v106, %v99
    %v109 = vmul.f32 %v106, %v100
    %v110 = vmul.f32 %v106, %v101
    %v111 = vmul.f32 %v106, %v102
    %v112 = vmul.f32 %v106, %v103
    %v113 = vmul.f32 %v106, %v104
    %v114 = vadd.f32 %v84, %v107
    %v115 = vadd.f32 %v85, %v108
    %v116 = vadd.f32 %v86, %v109
    %v117 = vadd.f32 %v87, %v110
    %v118 = vadd.f32 %v88, %v111
    %v119 = vadd.f32 %v89, %v112
    %v120 = vadd.f32 %v90, %v113
    %s121 = sld [smem:[#allocation2 + $0x80]]
    %v122 = vstv %s121
    %v123 = vmul.f32 %v122, %v98
    %v124 = vmul.f32 %v122, %v99
    %v125 = vmul.f32 %v122, %v100
    %v126 = vmul.f32 %v122, %v101
    %v127 = vmul.f32 %v122, %v102
    %v128 = vmul.f32 %v122, %v103
    %v129 = vmul.f32 %v122, %v104
    %v130 = vadd.f32 %v84, %v123
    %v131 = vadd.f32 %v85, %v124
    %v132 = vadd.f32 %v86, %v125
    %v133 = vadd.f32 %v87, %v126
    %v134 = vadd.f32 %v88, %v127
    %v135 = vadd.f32 %v89, %v128
    %v136 = vadd.f32 %v90, %v129
    %s137 = scalar_lea.vmem %s2, 28
    %v138 = vld [vmem:[%s137] sm:$0xf]
    %v139 = vld [vmem:[%s137 + $0x4] sm:$0xf]
    %v140 = vld [vmem:[%s137 + $0x8] sm:$0xf]
    %v141 = vld [vmem:[%s137 + $0xc] sm:$0xf]
    %v142 = vld [vmem:[%s137 + $0x10] sm:$0xf]
    %v143 = vld [vmem:[%s137 + $0x14] sm:$0xf]
    %v144 = vld [vmem:[%s137 + $0x18] sm:$0x1]
    %v145 = vunpack.c.l.bf16 %v138
    %v146 = vunpack.c.l.bf16 %v139
    %v147 = vunpack.c.l.bf16 %v140
    %v148 = vunpack.c.l.bf16 %v141
    %v149 = vunpack.c.l.bf16 %v142
    %v150 = vunpack.c.l.bf16 %v143
    %v151 = vunpack.c.l.bf16 %v144
    %s152 = sld [smem:[#allocation2 + $0x1]]
    %v153 = vstv %s152
    %v154 = vmul.f32 %v153, %v145
    %v155 = vmul.f32 %v153, %v146
    %v156 = vmul.f32 %v153, %v147
    %v157 = vmul.f32 %v153, %v148
    %v158 = vmul.f32 %v153, %v149
    %v159 = vmul.f32 %v153, %v150
    %v160 = vmul.f32 %v153, %v151
    %v161 = vadd.f32 %v114, %v154
    %v162 = vadd.f32 %v115, %v155
    %v163 = vadd.f32 %v116, %v156
    %v164 = vadd.f32 %v117, %v157
    %v165 = vadd.f32 %v118, %v158
    %v166 = vadd.f32 %v119, %v159
    %v167 = vadd.f32 %v120, %v160
    %s168 = sld [smem:[#allocation2 + $0x81]]
    %v169 = vstv %s168
    %v170 = vmul.f32 %v169, %v145
    %v171 = vmul.f32 %v169, %v146
    %v172 = vmul.f32 %v169, %v147
    %v173 = vmul.f32 %v169, %v148
    %v174 = vmul.f32 %v169, %v149
    %v175 = vmul.f32 %v169, %v150
    %v176 = vmul.f32 %v169, %v151
    %v177 = vadd.f32 %v130, %v170
    %v178 = vadd.f32 %v131, %v171
    %v179 = vadd.f32 %v132, %v172
    %v180 = vadd.f32 %v133, %v173
    %v181 = vadd.f32 %v134, %v174
    %v182 = vadd.f32 %v135, %v175
    %v183 = vadd.f32 %v136, %v176
    %s184 = scalar_lea.vmem %s2, 56
    %v185 = vld [vmem:[%s184] sm:$0xf]
    %v186 = vld [vmem:[%s184 + $0x4] sm:$0xf]
    %v187 = vld [vmem:[%s184 + $0x8] sm:$0xf]
    %v188 = vld [vmem:[%s184 + $0xc] sm:$0xf]
    %v189 = vld [vmem:[%s184 + $0x10] sm:$0xf]
    %v190 = vld [vmem:[%s184 + $0x14] sm:$0xf]
    %v191 = vld [vmem:[%s184 + $0x18] sm:$0x1]
    %v192 = vunpack.c.l.bf16 %v185
    %v193 = vunpack.c.l.bf16 %v186
    %v194 = vunpack.c.l.bf16 %v187
    %v195 = vunpack.c.l.bf16 %v188
    %v196 = vunpack.c.l.bf16 %v189
    %v197 = vunpack.c.l.bf16 %v190
    %v198 = vunpack.c.l.bf16 %v191
    %s199 = sld [smem:[#allocation2 + $0x2]]
    %v200 = vstv %s199
    %v201 = vmul.f32 %v200, %v192
    %v202 = vmul.f32 %v200, %v193
    %v203 = vmul.f32 %v200, %v194
    %v204 = vmul.f32 %v200, %v195
    %v205 = vmul.f32 %v200, %v196
    %v206 = vmul.f32 %v200, %v197
    %v207 = vmul.f32 %v200, %v198
    %v208 = vadd.f32 %v161, %v201
    %v209 = vadd.f32 %v162, %v202
    %v210 = vadd.f32 %v163, %v203
    %v211 = vadd.f32 %v164, %v204
    %v212 = vadd.f32 %v165, %v205
    %v213 = vadd.f32 %v166, %v206
    %v214 = vadd.f32 %v167, %v207
    %s215 = sld [smem:[#allocation2 + $0x82]]
    %v216 = vstv %s215
    %v217 = vmul.f32 %v216, %v192
    %v218 = vmul.f32 %v216, %v193
    %v219 = vmul.f32 %v216, %v194
    %v220 = vmul.f32 %v216, %v195
    %v221 = vmul.f32 %v216, %v196
    %v222 = vmul.f32 %v216, %v197
    %v223 = vmul.f32 %v216, %v198
    %v224 = vadd.f32 %v177, %v217
    %v225 = vadd.f32 %v178, %v218
    %v226 = vadd.f32 %v179, %v219
    %v227 = vadd.f32 %v180, %v220
    %v228 = vadd.f32 %v181, %v221
    %v229 = vadd.f32 %v182, %v222
    %v230 = vadd.f32 %v183, %v223
    %s231 = scalar_lea.vmem %s2, 84
    %v232 = vld [vmem:[%s231] sm:$0xf]
    %v233 = vld [vmem:[%s231 + $0x4] sm:$0xf]
    %v234 = vld [vmem:[%s231 + $0x8] sm:$0xf]
    %v235 = vld [vmem:[%s231 + $0xc] sm:$0xf]
    %v236 = vld [vmem:[%s231 + $0x10] sm:$0xf]
    %v237 = vld [vmem:[%s231 + $0x14] sm:$0xf]
    %v238 = vld [vmem:[%s231 + $0x18] sm:$0x1]
    %v239 = vunpack.c.l.bf16 %v232
    %v240 = vunpack.c.l.bf16 %v233
    %v241 = vunpack.c.l.bf16 %v234
    %v242 = vunpack.c.l.bf16 %v235
    %v243 = vunpack.c.l.bf16 %v236
    %v244 = vunpack.c.l.bf16 %v237
    %v245 = vunpack.c.l.bf16 %v238
    %s246 = sld [smem:[#allocation2 + $0x3]]
    %v247 = vstv %s246
    %v248 = vmul.f32 %v247, %v239
    %v249 = vmul.f32 %v247, %v240
    %v250 = vmul.f32 %v247, %v241
    %v251 = vmul.f32 %v247, %v242
    %v252 = vmul.f32 %v247, %v243
    %v253 = vmul.f32 %v247, %v244
    %v254 = vmul.f32 %v247, %v245
    %v255 = vadd.f32 %v208, %v248
    %v256 = vadd.f32 %v209, %v249
    %v257 = vadd.f32 %v210, %v250
    %v258 = vadd.f32 %v211, %v251
    %v259 = vadd.f32 %v212, %v252
    %v260 = vadd.f32 %v213, %v253
    %v261 = vadd.f32 %v214, %v254
    %s262 = sld [smem:[#allocation2 + $0x83]]
    %v263 = vstv %s262
    %v264 = vmul.f32 %v263, %v239
    %v265 = vmul.f32 %v263, %v240
    %v266 = vmul.f32 %v263, %v241
    %v267 = vmul.f32 %v263, %v242
    %v268 = vmul.f32 %v263, %v243
    %v269 = vmul.f32 %v263, %v244
    %v270 = vmul.f32 %v263, %v245
    %v271 = vadd.f32 %v224, %v264
    %v272 = vadd.f32 %v225, %v265
    %v273 = vadd.f32 %v226, %v266
    %v274 = vadd.f32 %v227, %v267
    %v275 = vadd.f32 %v228, %v268
    %v276 = vadd.f32 %v229, %v269
    %v277 = vadd.f32 %v230, %v270
    %s278 = scalar_lea.vmem %s2, 112
    %v279 = vld [vmem:[%s278] sm:$0xf]
    %v280 = vld [vmem:[%s278 + $0x4] sm:$0xf]
    %v281 = vld [vmem:[%s278 + $0x8] sm:$0xf]
    %v282 = vld [vmem:[%s278 + $0xc] sm:$0xf]
    %v283 = vld [vmem:[%s278 + $0x10] sm:$0xf]
    %v284 = vld [vmem:[%s278 + $0x14] sm:$0xf]
    %v285 = vld [vmem:[%s278 + $0x18] sm:$0x1]
    %v286 = vunpack.c.l.bf16 %v279
    %v287 = vunpack.c.l.bf16 %v280
    %v288 = vunpack.c.l.bf16 %v281
    %v289 = vunpack.c.l.bf16 %v282
    %v290 = vunpack.c.l.bf16 %v283
    %v291 = vunpack.c.l.bf16 %v284
    %v292 = vunpack.c.l.bf16 %v285
    %s293 = sld [smem:[#allocation2 + $0x4]]
    %v294 = vstv %s293
    %v295 = vmul.f32 %v294, %v286
    %v296 = vmul.f32 %v294, %v287
    %v297 = vmul.f32 %v294, %v288
    %v298 = vmul.f32 %v294, %v289
    %v299 = vmul.f32 %v294, %v290
    %v300 = vmul.f32 %v294, %v291
    %v301 = vmul.f32 %v294, %v292
    %v302 = vadd.f32 %v255, %v295
    %v303 = vadd.f32 %v256, %v296
    %v304 = vadd.f32 %v257, %v297
    %v305 = vadd.f32 %v258, %v298
    %v306 = vadd.f32 %v259, %v299
    %v307 = vadd.f32 %v260, %v300
    %v308 = vadd.f32 %v261, %v301
    %s309 = sld [smem:[#allocation2 + $0x84]]
    %v310 = vstv %s309
    %v311 = vmul.f32 %v310, %v286
    %v312 = vmul.f32 %v310, %v287
    %v313 = vmul.f32 %v310, %v288
    %v314 = vmul.f32 %v310, %v289
    %v315 = vmul.f32 %v310, %v290
    %v316 = vmul.f32 %v310, %v291
    %v317 = vmul.f32 %v310, %v292
    %v318 = vadd.f32 %v271, %v311
    %v319 = vadd.f32 %v272, %v312
    %v320 = vadd.f32 %v273, %v313
    %v321 = vadd.f32 %v274, %v314
    %v322 = vadd.f32 %v275, %v315
    %v323 = vadd.f32 %v276, %v316
    %v324 = vadd.f32 %v277, %v317
    %s325 = scalar_lea.vmem %s2, 140
    %v326 = vld [vmem:[%s325] sm:$0xf]
    %v327 = vld [vmem:[%s325 + $0x4] sm:$0xf]
    %v328 = vld [vmem:[%s325 + $0x8] sm:$0xf]
    %v329 = vld [vmem:[%s325 + $0xc] sm:$0xf]
    %v330 = vld [vmem:[%s325 + $0x10] sm:$0xf]
    %v331 = vld [vmem:[%s325 + $0x14] sm:$0xf]
    %v332 = vld [vmem:[%s325 + $0x18] sm:$0x1]
    %v333 = vunpack.c.l.bf16 %v326
    %v334 = vunpack.c.l.bf16 %v327
    %v335 = vunpack.c.l.bf16 %v328
    %v336 = vunpack.c.l.bf16 %v329
    %v337 = vunpack.c.l.bf16 %v330
    %v338 = vunpack.c.l.bf16 %v331
    %v339 = vunpack.c.l.bf16 %v332
    %s340 = sld [smem:[#allocation2 + $0x5]]
    %v341 = vstv %s340
    %v342 = vmul.f32 %v341, %v333
    %v343 = vmul.f32 %v341, %v334
    %v344 = vmul.f32 %v341, %v335
    %v345 = vmul.f32 %v341, %v336
    %v346 = vmul.f32 %v341, %v337
    %v347 = vmul.f32 %v341, %v338
    %v348 = vmul.f32 %v341, %v339
    %v349 = vadd.f32 %v302, %v342
    %v350 = vadd.f32 %v303, %v343
    %v351 = vadd.f32 %v304, %v344
    %v352 = vadd.f32 %v305, %v345
    %v353 = vadd.f32 %v306, %v346
    %v354 = vadd.f32 %v307, %v347
    %v355 = vadd.f32 %v308, %v348
    %s356 = sld [smem:[#allocation2 + $0x85]]
    %v357 = vstv %s356
    %v358 = vmul.f32 %v357, %v333
    %v359 = vmul.f32 %v357, %v334
    %v360 = vmul.f32 %v357, %v335
    %v361 = vmul.f32 %v357, %v336
    %v362 = vmul.f32 %v357, %v337
    %v363 = vmul.f32 %v357, %v338
    %v364 = vmul.f32 %v357, %v339
    %v365 = vadd.f32 %v318, %v358
    %v366 = vadd.f32 %v319, %v359
    %v367 = vadd.f32 %v320, %v360
    %v368 = vadd.f32 %v321, %v361
    %v369 = vadd.f32 %v322, %v362
    %v370 = vadd.f32 %v323, %v363
    %v371 = vadd.f32 %v324, %v364
    %s372 = scalar_lea.vmem %s2, 168
    %v373 = vld [vmem:[%s372] sm:$0xf]
    %v374 = vld [vmem:[%s372 + $0x4] sm:$0xf]
    %v375 = vld [vmem:[%s372 + $0x8] sm:$0xf]
    %v376 = vld [vmem:[%s372 + $0xc] sm:$0xf]
    %v377 = vld [vmem:[%s372 + $0x10] sm:$0xf]
    %v378 = vld [vmem:[%s372 + $0x14] sm:$0xf]
    %v379 = vld [vmem:[%s372 + $0x18] sm:$0x1]
    %v380 = vunpack.c.l.bf16 %v373
    %v381 = vunpack.c.l.bf16 %v374
    %v382 = vunpack.c.l.bf16 %v375
    %v383 = vunpack.c.l.bf16 %v376
    %v384 = vunpack.c.l.bf16 %v377
    %v385 = vunpack.c.l.bf16 %v378
    %v386 = vunpack.c.l.bf16 %v379
    %s387 = sld [smem:[#allocation2 + $0x6]]
    %v388 = vstv %s387
    %v389 = vmul.f32 %v388, %v380
    %v390 = vmul.f32 %v388, %v381
    %v391 = vmul.f32 %v388, %v382
    %v392 = vmul.f32 %v388, %v383
    %v393 = vmul.f32 %v388, %v384
    %v394 = vmul.f32 %v388, %v385
    %v395 = vmul.f32 %v388, %v386
    %v396 = vadd.f32 %v349, %v389
    %v397 = vadd.f32 %v350, %v390
    %v398 = vadd.f32 %v351, %v391
    %v399 = vadd.f32 %v352, %v392
    %v400 = vadd.f32 %v353, %v393
    %v401 = vadd.f32 %v354, %v394
    %v402 = vadd.f32 %v355, %v395
    %s403 = sld [smem:[#allocation2 + $0x86]]
    %v404 = vstv %s403
    %v405 = vmul.f32 %v404, %v380
    %v406 = vmul.f32 %v404, %v381
    %v407 = vmul.f32 %v404, %v382
    %v408 = vmul.f32 %v404, %v383
    %v409 = vmul.f32 %v404, %v384
    %v410 = vmul.f32 %v404, %v385
    %v411 = vmul.f32 %v404, %v386
    %v412 = vadd.f32 %v365, %v405
    %v413 = vadd.f32 %v366, %v406
    %v414 = vadd.f32 %v367, %v407
    %v415 = vadd.f32 %v368, %v408
    %v416 = vadd.f32 %v369, %v409
    %v417 = vadd.f32 %v370, %v410
    %v418 = vadd.f32 %v371, %v411
    %s419 = scalar_lea.vmem %s2, 196
    %v420 = vld [vmem:[%s419] sm:$0xf]
    %v421 = vld [vmem:[%s419 + $0x4] sm:$0xf]
    %v422 = vld [vmem:[%s419 + $0x8] sm:$0xf]
    %v423 = vld [vmem:[%s419 + $0xc] sm:$0xf]
    %v424 = vld [vmem:[%s419 + $0x10] sm:$0xf]
    %v425 = vld [vmem:[%s419 + $0x14] sm:$0xf]
    %v426 = vld [vmem:[%s419 + $0x18] sm:$0x1]
    %v427 = vunpack.c.l.bf16 %v420
    %v428 = vunpack.c.l.bf16 %v421
    %v429 = vunpack.c.l.bf16 %v422
    %v430 = vunpack.c.l.bf16 %v423
    %v431 = vunpack.c.l.bf16 %v424
    %v432 = vunpack.c.l.bf16 %v425
    %v433 = vunpack.c.l.bf16 %v426
    %s434 = sld [smem:[#allocation2 + $0x7]]
    %v435 = vstv %s434
    %v436 = vmul.f32 %v435, %v427
    %v437 = vmul.f32 %v435, %v428
    %v438 = vmul.f32 %v435, %v429
    %v439 = vmul.f32 %v435, %v430
    %v440 = vmul.f32 %v435, %v431
    %v441 = vmul.f32 %v435, %v432
    %v442 = vmul.f32 %v435, %v433
    %v443 = vadd.f32 %v396, %v436
    %v444 = vadd.f32 %v397, %v437
    %v445 = vadd.f32 %v398, %v438
    %v446 = vadd.f32 %v399, %v439
    %v447 = vadd.f32 %v400, %v440
    %v448 = vadd.f32 %v401, %v441
    %v449 = vadd.f32 %v402, %v442
    %s450 = sld [smem:[#allocation2 + $0x87]]
    %v451 = vstv %s450
    %v452 = vmul.f32 %v451, %v427
    %v453 = vmul.f32 %v451, %v428
    %v454 = vmul.f32 %v451, %v429
    %v455 = vmul.f32 %v451, %v430
    %v456 = vmul.f32 %v451, %v431
    %v457 = vmul.f32 %v451, %v432
    %v458 = vmul.f32 %v451, %v433
    %v459 = vadd.f32 %v412, %v452
    %v460 = vadd.f32 %v413, %v453
    %v461 = vadd.f32 %v414, %v454
    %v462 = vadd.f32 %v415, %v455
    %v463 = vadd.f32 %v416, %v456
    %v464 = vadd.f32 %v417, %v457
    %v465 = vadd.f32 %v418, %v458
    %s466 = scalar_lea.vmem %s2, 224
    %v467 = vld [vmem:[%s466] sm:$0xf]
    %v468 = vld [vmem:[%s466 + $0x4] sm:$0xf]
    %v469 = vld [vmem:[%s466 + $0x8] sm:$0xf]
    %v470 = vld [vmem:[%s466 + $0xc] sm:$0xf]
    %v471 = vld [vmem:[%s466 + $0x10] sm:$0xf]
    %v472 = vld [vmem:[%s466 + $0x14] sm:$0xf]
    %v473 = vld [vmem:[%s466 + $0x18] sm:$0x1]
    %v474 = vunpack.c.l.bf16 %v467
    %v475 = vunpack.c.l.bf16 %v468
    %v476 = vunpack.c.l.bf16 %v469
    %v477 = vunpack.c.l.bf16 %v470
    %v478 = vunpack.c.l.bf16 %v471
    %v479 = vunpack.c.l.bf16 %v472
    %v480 = vunpack.c.l.bf16 %v473
    %s481 = sld [smem:[#allocation2 + $0x8]]
    %v482 = vstv %s481
    %v483 = vmul.f32 %v482, %v474
    %v484 = vmul.f32 %v482, %v475
    %v485 = vmul.f32 %v482, %v476
    %v486 = vmul.f32 %v482, %v477
    %v487 = vmul.f32 %v482, %v478
    %v488 = vmul.f32 %v482, %v479
    %v489 = vmul.f32 %v482, %v480
    %v490 = vadd.f32 %v443, %v483
    %v491 = vadd.f32 %v444, %v484
    %v492 = vadd.f32 %v445, %v485
    %v493 = vadd.f32 %v446, %v486
    %v494 = vadd.f32 %v447, %v487
    %v495 = vadd.f32 %v448, %v488
    %v496 = vadd.f32 %v449, %v489
    %s497 = sld [smem:[#allocation2 + $0x88]]
    %v498 = vstv %s497
    %v499 = vmul.f32 %v498, %v474
    %v500 = vmul.f32 %v498, %v475
    %v501 = vmul.f32 %v498, %v476
    %v502 = vmul.f32 %v498, %v477
    %v503 = vmul.f32 %v498, %v478
    %v504 = vmul.f32 %v498, %v479
    %v505 = vmul.f32 %v498, %v480
    %v506 = vadd.f32 %v459, %v499
    %v507 = vadd.f32 %v460, %v500
    %v508 = vadd.f32 %v461, %v501
    %v509 = vadd.f32 %v462, %v502
    %v510 = vadd.f32 %v463, %v503
    %v511 = vadd.f32 %v464, %v504
    %v512 = vadd.f32 %v465, %v505
    %s513 = scalar_lea.vmem %s2, 252
    %v514 = vld [vmem:[%s513] sm:$0xf]
    %v515 = vld [vmem:[%s513 + $0x4] sm:$0xf]
    %v516 = vld [vmem:[%s513 + $0x8] sm:$0xf]
    %v517 = vld [vmem:[%s513 + $0xc] sm:$0xf]
    %v518 = vld [vmem:[%s513 + $0x10] sm:$0xf]
    %v519 = vld [vmem:[%s513 + $0x14] sm:$0xf]
    %v520 = vld [vmem:[%s513 + $0x18] sm:$0x1]
    %v521 = vunpack.c.l.bf16 %v514
    %v522 = vunpack.c.l.bf16 %v515
    %v523 = vunpack.c.l.bf16 %v516
    %v524 = vunpack.c.l.bf16 %v517
    %v525 = vunpack.c.l.bf16 %v518
    %v526 = vunpack.c.l.bf16 %v519
    %v527 = vunpack.c.l.bf16 %v520
    %s528 = sld [smem:[#allocation2 + $0x9]]
    %v529 = vstv %s528
    %v530 = vmul.f32 %v529, %v521
    %v531 = vmul.f32 %v529, %v522
    %v532 = vmul.f32 %v529, %v523
    %v533 = vmul.f32 %v529, %v524
    %v534 = vmul.f32 %v529, %v525
    %v535 = vmul.f32 %v529, %v526
    %v536 = vmul.f32 %v529, %v527
    %v537 = vadd.f32 %v490, %v530
    %v538 = vadd.f32 %v491, %v531
    %v539 = vadd.f32 %v492, %v532
    %v540 = vadd.f32 %v493, %v533
    %v541 = vadd.f32 %v494, %v534
    %v542 = vadd.f32 %v495, %v535
    %v543 = vadd.f32 %v496, %v536
    %s544 = sld [smem:[#allocation2 + $0x89]]
    %v545 = vstv %s544
    %v546 = vmul.f32 %v545, %v521
    %v547 = vmul.f32 %v545, %v522
    %v548 = vmul.f32 %v545, %v523
    %v549 = vmul.f32 %v545, %v524
    %v550 = vmul.f32 %v545, %v525
    %v551 = vmul.f32 %v545, %v526
    %v552 = vmul.f32 %v545, %v527
    %v553 = vadd.f32 %v506, %v546
    %v554 = vadd.f32 %v507, %v547
    %v555 = vadd.f32 %v508, %v548
    %v556 = vadd.f32 %v509, %v549
    %v557 = vadd.f32 %v510, %v550
    %v558 = vadd.f32 %v511, %v551
    %v559 = vadd.f32 %v512, %v552
    %s560 = scalar_lea.vmem %s2, 280
    %v561 = vld [vmem:[%s560] sm:$0xf]
    %v562 = vld [vmem:[%s560 + $0x4] sm:$0xf]
    %v563 = vld [vmem:[%s560 + $0x8] sm:$0xf]
    %v564 = vld [vmem:[%s560 + $0xc] sm:$0xf]
    %v565 = vld [vmem:[%s560 + $0x10] sm:$0xf]
    %v566 = vld [vmem:[%s560 + $0x14] sm:$0xf]
    %v567 = vld [vmem:[%s560 + $0x18] sm:$0x1]
    %v568 = vunpack.c.l.bf16 %v561
    %v569 = vunpack.c.l.bf16 %v562
    %v570 = vunpack.c.l.bf16 %v563
    %v571 = vunpack.c.l.bf16 %v564
    %v572 = vunpack.c.l.bf16 %v565
    %v573 = vunpack.c.l.bf16 %v566
    %v574 = vunpack.c.l.bf16 %v567
    %s575 = sld [smem:[#allocation2 + $0xa]]
    %v576 = vstv %s575
    %v577 = vmul.f32 %v576, %v568
    %v578 = vmul.f32 %v576, %v569
    %v579 = vmul.f32 %v576, %v570
    %v580 = vmul.f32 %v576, %v571
    %v581 = vmul.f32 %v576, %v572
    %v582 = vmul.f32 %v576, %v573
    %v583 = vmul.f32 %v576, %v574
    %v584 = vadd.f32 %v537, %v577
    %v585 = vadd.f32 %v538, %v578
    %v586 = vadd.f32 %v539, %v579
    %v587 = vadd.f32 %v540, %v580
    %v588 = vadd.f32 %v541, %v581
    %v589 = vadd.f32 %v542, %v582
    %v590 = vadd.f32 %v543, %v583
    %s591 = sld [smem:[#allocation2 + $0x8a]]
    %v592 = vstv %s591
    %v593 = vmul.f32 %v592, %v568
    %v594 = vmul.f32 %v592, %v569
    %v595 = vmul.f32 %v592, %v570
    %v596 = vmul.f32 %v592, %v571
    %v597 = vmul.f32 %v592, %v572
    %v598 = vmul.f32 %v592, %v573
    %v599 = vmul.f32 %v592, %v574
    %v600 = vadd.f32 %v553, %v593
    %v601 = vadd.f32 %v554, %v594
    %v602 = vadd.f32 %v555, %v595
    %v603 = vadd.f32 %v556, %v596
    %v604 = vadd.f32 %v557, %v597
    %v605 = vadd.f32 %v558, %v598
    %v606 = vadd.f32 %v559, %v599
    %s607 = scalar_lea.vmem %s2, 308
    %v608 = vld [vmem:[%s607] sm:$0xf]
    %v609 = vld [vmem:[%s607 + $0x4] sm:$0xf]
    %v610 = vld [vmem:[%s607 + $0x8] sm:$0xf]
    %v611 = vld [vmem:[%s607 + $0xc] sm:$0xf]
    %v612 = vld [vmem:[%s607 + $0x10] sm:$0xf]
    %v613 = vld [vmem:[%s607 + $0x14] sm:$0xf]
    %v614 = vld [vmem:[%s607 + $0x18] sm:$0x1]
    %v615 = vunpack.c.l.bf16 %v608
    %v616 = vunpack.c.l.bf16 %v609
    %v617 = vunpack.c.l.bf16 %v610
    %v618 = vunpack.c.l.bf16 %v611
    %v619 = vunpack.c.l.bf16 %v612
    %v620 = vunpack.c.l.bf16 %v613
    %v621 = vunpack.c.l.bf16 %v614
    %s622 = sld [smem:[#allocation2 + $0xb]]
    %v623 = vstv %s622
    %v624 = vmul.f32 %v623, %v615
    %v625 = vmul.f32 %v623, %v616
    %v626 = vmul.f32 %v623, %v617
    %v627 = vmul.f32 %v623, %v618
    %v628 = vmul.f32 %v623, %v619
    %v629 = vmul.f32 %v623, %v620
    %v630 = vmul.f32 %v623, %v621
    %v631 = vadd.f32 %v584, %v624
    %v632 = vadd.f32 %v585, %v625
    %v633 = vadd.f32 %v586, %v626
    %v634 = vadd.f32 %v587, %v627
    %v635 = vadd.f32 %v588, %v628
    %v636 = vadd.f32 %v589, %v629
    %v637 = vadd.f32 %v590, %v630
    %s638 = sld [smem:[#allocation2 + $0x8b]]
    %v639 = vstv %s638
    %v640 = vmul.f32 %v639, %v615
    %v641 = vmul.f32 %v639, %v616
    %v642 = vmul.f32 %v639, %v617
    %v643 = vmul.f32 %v639, %v618
    %v644 = vmul.f32 %v639, %v619
    %v645 = vmul.f32 %v639, %v620
    %v646 = vmul.f32 %v639, %v621
    %v647 = vadd.f32 %v600, %v640
    %v648 = vadd.f32 %v601, %v641
    %v649 = vadd.f32 %v602, %v642
    %v650 = vadd.f32 %v603, %v643
    %v651 = vadd.f32 %v604, %v644
    %v652 = vadd.f32 %v605, %v645
    %v653 = vadd.f32 %v606, %v646
    %s654 = scalar_lea.vmem %s2, 336
    %v655 = vld [vmem:[%s654] sm:$0xf]
    %v656 = vld [vmem:[%s654 + $0x4] sm:$0xf]
    %v657 = vld [vmem:[%s654 + $0x8] sm:$0xf]
    %v658 = vld [vmem:[%s654 + $0xc] sm:$0xf]
    %v659 = vld [vmem:[%s654 + $0x10] sm:$0xf]
    %v660 = vld [vmem:[%s654 + $0x14] sm:$0xf]
    %v661 = vld [vmem:[%s654 + $0x18] sm:$0x1]
    %v662 = vunpack.c.l.bf16 %v655
    %v663 = vunpack.c.l.bf16 %v656
    %v664 = vunpack.c.l.bf16 %v657
    %v665 = vunpack.c.l.bf16 %v658
    %v666 = vunpack.c.l.bf16 %v659
    %v667 = vunpack.c.l.bf16 %v660
    %v668 = vunpack.c.l.bf16 %v661
    %s669 = sld [smem:[#allocation2 + $0xc]]
    %v670 = vstv %s669
    %v671 = vmul.f32 %v670, %v662
    %v672 = vmul.f32 %v670, %v663
    %v673 = vmul.f32 %v670, %v664
    %v674 = vmul.f32 %v670, %v665
    %v675 = vmul.f32 %v670, %v666
    %v676 = vmul.f32 %v670, %v667
    %v677 = vmul.f32 %v670, %v668
    %v678 = vadd.f32 %v631, %v671
    %v679 = vadd.f32 %v632, %v672
    %v680 = vadd.f32 %v633, %v673
    %v681 = vadd.f32 %v634, %v674
    %v682 = vadd.f32 %v635, %v675
    %v683 = vadd.f32 %v636, %v676
    %v684 = vadd.f32 %v637, %v677
    %s685 = sld [smem:[#allocation2 + $0x8c]]
    %v686 = vstv %s685
    %v687 = vmul.f32 %v686, %v662
    %v688 = vmul.f32 %v686, %v663
    %v689 = vmul.f32 %v686, %v664
    %v690 = vmul.f32 %v686, %v665
    %v691 = vmul.f32 %v686, %v666
    %v692 = vmul.f32 %v686, %v667
    %v693 = vmul.f32 %v686, %v668
    %v694 = vadd.f32 %v647, %v687
    %v695 = vadd.f32 %v648, %v688
    %v696 = vadd.f32 %v649, %v689
    %v697 = vadd.f32 %v650, %v690
    %v698 = vadd.f32 %v651, %v691
    %v699 = vadd.f32 %v652, %v692
    %v700 = vadd.f32 %v653, %v693
    %s701 = scalar_lea.vmem %s2, 364
    %v702 = vld [vmem:[%s701] sm:$0xf]
    %v703 = vld [vmem:[%s701 + $0x4] sm:$0xf]
    %v704 = vld [vmem:[%s701 + $0x8] sm:$0xf]
    %v705 = vld [vmem:[%s701 + $0xc] sm:$0xf]
    %v706 = vld [vmem:[%s701 + $0x10] sm:$0xf]
    %v707 = vld [vmem:[%s701 + $0x14] sm:$0xf]
    %v708 = vld [vmem:[%s701 + $0x18] sm:$0x1]
    %v709 = vunpack.c.l.bf16 %v702
    %v710 = vunpack.c.l.bf16 %v703
    %v711 = vunpack.c.l.bf16 %v704
    %v712 = vunpack.c.l.bf16 %v705
    %v713 = vunpack.c.l.bf16 %v706
    %v714 = vunpack.c.l.bf16 %v707
    %v715 = vunpack.c.l.bf16 %v708
    %s716 = sld [smem:[#allocation2 + $0xd]]
    %v717 = vstv %s716
    %v718 = vmul.f32 %v717, %v709
    %v719 = vmul.f32 %v717, %v710
    %v720 = vmul.f32 %v717, %v711
    %v721 = vmul.f32 %v717, %v712
    %v722 = vmul.f32 %v717, %v713
    %v723 = vmul.f32 %v717, %v714
    %v724 = vmul.f32 %v717, %v715
    %v725 = vadd.f32 %v678, %v718
    %v726 = vadd.f32 %v679, %v719
    %v727 = vadd.f32 %v680, %v720
    %v728 = vadd.f32 %v681, %v721
    %v729 = vadd.f32 %v682, %v722
    %v730 = vadd.f32 %v683, %v723
    %v731 = vadd.f32 %v684, %v724
    %s732 = sld [smem:[#allocation2 + $0x8d]]
    %v733 = vstv %s732
    %v734 = vmul.f32 %v733, %v709
    %v735 = vmul.f32 %v733, %v710
    %v736 = vmul.f32 %v733, %v711
    %v737 = vmul.f32 %v733, %v712
    %v738 = vmul.f32 %v733, %v713
    %v739 = vmul.f32 %v733, %v714
    %v740 = vmul.f32 %v733, %v715
    %v741 = vadd.f32 %v694, %v734
    %v742 = vadd.f32 %v695, %v735
    %v743 = vadd.f32 %v696, %v736
    %v744 = vadd.f32 %v697, %v737
    %v745 = vadd.f32 %v698, %v738
    %v746 = vadd.f32 %v699, %v739
    %v747 = vadd.f32 %v700, %v740
    %s748 = scalar_lea.vmem %s2, 392
    %v749 = vld [vmem:[%s748] sm:$0xf]
    %v750 = vld [vmem:[%s748 + $0x4] sm:$0xf]
    %v751 = vld [vmem:[%s748 + $0x8] sm:$0xf]
    %v752 = vld [vmem:[%s748 + $0xc] sm:$0xf]
    %v753 = vld [vmem:[%s748 + $0x10] sm:$0xf]
    %v754 = vld [vmem:[%s748 + $0x14] sm:$0xf]
    %v755 = vld [vmem:[%s748 + $0x18] sm:$0x1]
    %v756 = vunpack.c.l.bf16 %v749
    %v757 = vunpack.c.l.bf16 %v750
    %v758 = vunpack.c.l.bf16 %v751
    %v759 = vunpack.c.l.bf16 %v752
    %v760 = vunpack.c.l.bf16 %v753
    %v761 = vunpack.c.l.bf16 %v754
    %v762 = vunpack.c.l.bf16 %v755
    %s763 = sld [smem:[#allocation2 + $0xe]]
    %v764 = vstv %s763
    %v765 = vmul.f32 %v764, %v756
    %v766 = vmul.f32 %v764, %v757
    %v767 = vmul.f32 %v764, %v758
    %v768 = vmul.f32 %v764, %v759
    %v769 = vmul.f32 %v764, %v760
    %v770 = vmul.f32 %v764, %v761
    %v771 = vmul.f32 %v764, %v762
    %v772 = vadd.f32 %v725, %v765
    %v773 = vadd.f32 %v726, %v766
    %v774 = vadd.f32 %v727, %v767
    %v775 = vadd.f32 %v728, %v768
    %v776 = vadd.f32 %v729, %v769
    %v777 = vadd.f32 %v730, %v770
    %v778 = vadd.f32 %v731, %v771
    %s779 = sld [smem:[#allocation2 + $0x8e]]
    %v780 = vstv %s779
    %v781 = vmul.f32 %v780, %v756
    %v782 = vmul.f32 %v780, %v757
    %v783 = vmul.f32 %v780, %v758
    %v784 = vmul.f32 %v780, %v759
    %v785 = vmul.f32 %v780, %v760
    %v786 = vmul.f32 %v780, %v761
    %v787 = vmul.f32 %v780, %v762
    %v788 = vadd.f32 %v741, %v781
    %v789 = vadd.f32 %v742, %v782
    %v790 = vadd.f32 %v743, %v783
    %v791 = vadd.f32 %v744, %v784
    %v792 = vadd.f32 %v745, %v785
    %v793 = vadd.f32 %v746, %v786
    %v794 = vadd.f32 %v747, %v787
    %s795 = scalar_lea.vmem %s2, 420
    %v796 = vld [vmem:[%s795] sm:$0xf]
    %v797 = vld [vmem:[%s795 + $0x4] sm:$0xf]
    %v798 = vld [vmem:[%s795 + $0x8] sm:$0xf]
    %v799 = vld [vmem:[%s795 + $0xc] sm:$0xf]
    %v800 = vld [vmem:[%s795 + $0x10] sm:$0xf]
    %v801 = vld [vmem:[%s795 + $0x14] sm:$0xf]
    %v802 = vld [vmem:[%s795 + $0x18] sm:$0x1]
    %v803 = vunpack.c.l.bf16 %v796
    %v804 = vunpack.c.l.bf16 %v797
    %v805 = vunpack.c.l.bf16 %v798
    %v806 = vunpack.c.l.bf16 %v799
    %v807 = vunpack.c.l.bf16 %v800
    %v808 = vunpack.c.l.bf16 %v801
    %v809 = vunpack.c.l.bf16 %v802
    %s810 = sld [smem:[#allocation2 + $0xf]]
    %v811 = vstv %s810
    %v812 = vmul.f32 %v811, %v803
    %v813 = vmul.f32 %v811, %v804
    %v814 = vmul.f32 %v811, %v805
    %v815 = vmul.f32 %v811, %v806
    %v816 = vmul.f32 %v811, %v807
    %v817 = vmul.f32 %v811, %v808
    %v818 = vmul.f32 %v811, %v809
    %v819 = vadd.f32 %v772, %v812
    %v820 = vadd.f32 %v773, %v813
    %v821 = vadd.f32 %v774, %v814
    %v822 = vadd.f32 %v775, %v815
    %v823 = vadd.f32 %v776, %v816
    %v824 = vadd.f32 %v777, %v817
    %v825 = vadd.f32 %v778, %v818
    %s826 = sld [smem:[#allocation2 + $0x8f]]
    %v827 = vstv %s826
    %v828 = vmul.f32 %v827, %v803
    %v829 = vmul.f32 %v827, %v804
    %v830 = vmul.f32 %v827, %v805
    %v831 = vmul.f32 %v827, %v806
    %v832 = vmul.f32 %v827, %v807
    %v833 = vmul.f32 %v827, %v808
    %v834 = vmul.f32 %v827, %v809
    %v835 = vadd.f32 %v788, %v828
    %v836 = vadd.f32 %v789, %v829
    %v837 = vadd.f32 %v790, %v830
    %v838 = vadd.f32 %v791, %v831
    %v839 = vadd.f32 %v792, %v832
    %v840 = vadd.f32 %v793, %v833
    %v841 = vadd.f32 %v794, %v834
    %vm849 = vcmask 1040384
    %v850 = vrot.slane %v835, 7
    %v851 = vrot.slane %v836, 7
    %v852 = vsel %vm849, %v850, %v851
    %v853 = vrot.slane %v837, 7
    %v854 = vsel %vm849, %v851, %v853
    %v855 = vrot.slane %v838, 7
    %v856 = vsel %vm849, %v853, %v855
    %v857 = vrot.slane %v839, 7
    %v858 = vsel %vm849, %v855, %v857
    %v859 = vrot.slane %v840, 7
    %v860 = vsel %vm849, %v857, %v859
    %v861 = vrot.slane %v841, 7
    %v862 = vsel %vm849, %v859, %v861
    %v870 = vsel %vm849, %v825, %v850
    %v871 = vmax.f32 %v819, 0.0
    %v872 = vmax.f32 %v820, 0.0
    %v873 = vmax.f32 %v821, 0.0
    %v874 = vmax.f32 %v822, 0.0
    %v875 = vmax.f32 %v823, 0.0
    %v876 = vmax.f32 %v824, 0.0
    %v877 = vmax.f32 %v870, 0.0
    %v878 = vmax.f32 %v852, 0.0
    %v879 = vmax.f32 %v854, 0.0
    %v880 = vmax.f32 %v856, 0.0
    %v881 = vmax.f32 %v858, 0.0
    %v882 = vmax.f32 %v860, 0.0
    %v883 = vmax.f32 %v862, 0.0
    %vm884 = vcmask 1041408
    %v885 = vsel %vm884, %v883, 0.0
    %887 = vset.pattern.permute.xlu0 0
    %888 = vperm.xlu0 %887, %v43
    %v889 = vpop.permute.xlu0 %888
    %891 = vset.pattern.permute.xlu0 0
    %892 = vperm.xlu0 %891, %v44
    %v893 = vpop.permute.xlu0 %892
    %895 = vset.pattern.permute.xlu0 0
    %896 = vperm.xlu0 %895, %v45
    %v897 = vpop.permute.xlu0 %896
    %899 = vset.pattern.permute.xlu0 0
    %900 = vperm.xlu0 %899, %v46
    %v901 = vpop.permute.xlu0 %900
    %903 = vset.pattern.permute.xlu0 0
    %904 = vperm.xlu0 %903, %v47
    %v905 = vpop.permute.xlu0 %904
    %907 = vset.pattern.permute.xlu0 0
    %908 = vperm.xlu0 %907, %v48
    %v909 = vpop.permute.xlu0 %908
    %911 = vset.pattern.permute.xlu0 0
    %912 = vperm.xlu0 %911, %v49
    %v913 = vpop.permute.xlu0 %912
    %915 = vset.pattern.permute.xlu0 0
    %916 = vperm.xlu0 %915, %v50
    %v917 = vpop.permute.xlu0 %916
    %919 = vset.pattern.permute.xlu0 0
    %920 = vperm.xlu0 %919, %v51
    %v921 = vpop.permute.xlu0 %920
    %923 = vset.pattern.permute.xlu0 0
    %924 = vperm.xlu0 %923, %v52
    %v925 = vpop.permute.xlu0 %924
    %927 = vset.pattern.permute.xlu0 0
    %928 = vperm.xlu0 %927, %v53
    %v929 = vpop.permute.xlu0 %928
    %931 = vset.pattern.permute.xlu0 0
    %932 = vperm.xlu0 %931, %v54
    %v933 = vpop.permute.xlu0 %932
    %935 = vset.pattern.permute.xlu0 0
    %936 = vperm.xlu0 %935, %v55
    %v937 = vpop.permute.xlu0 %936
    %v938 = vrot.slane %v889, 7
    %v939 = vrot.slane %v893, 7
    %v940 = vsel %vm849, %v938, %v939
    %v941 = vrot.slane %v897, 7
    %v942 = vsel %vm849, %v939, %v941
    %v943 = vrot.slane %v901, 7
    %v944 = vsel %vm849, %v941, %v943
    %v945 = vrot.slane %v905, 7
    %v946 = vsel %vm849, %v943, %v945
    %v947 = vrot.slane %v909, 7
    %v948 = vsel %vm849, %v945, %v947
    %v949 = vrot.slane %v913, 7
    %v950 = vsel %vm849, %v947, %v949
    %v951 = vrot.slane %v917, 7
    %v952 = vsel %vm849, %v949, %v951
    %v953 = vrot.slane %v921, 7
    %v954 = vsel %vm849, %v951, %v953
    %v955 = vrot.slane %v925, 7
    %v956 = vsel %vm849, %v953, %v955
    %v957 = vrot.slane %v929, 7
    %v958 = vsel %vm849, %v955, %v957
    %v959 = vrot.slane %v933, 7
    %v960 = vsel %vm849, %v957, %v959
    %v961 = vrot.slane %v937, 7
    %v962 = vsel %vm849, %v959, %v961
    %v976 = vmul.f32 %v871, %v938
    %v977 = vmul.f32 %v872, %v940
    %v978 = vmul.f32 %v873, %v942
    %v979 = vmul.f32 %v874, %v944
    %v980 = vmul.f32 %v875, %v946
    %v981 = vmul.f32 %v876, %v948
    %v982 = vmul.f32 %v877, %v950
    %v983 = vmul.f32 %v878, %v952
    %v984 = vmul.f32 %v879, %v954
    %v985 = vmul.f32 %v880, %v956
    %v986 = vmul.f32 %v881, %v958
    %v987 = vmul.f32 %v882, %v960
    %v988 = vmul.f32 %v885, %v962
    %990 = vset.pattern.permute.xlu0 0
    %991 = vperm.xlu0 %990, %v57
    %v992 = vpop.permute.xlu0 %991
    %994 = vset.pattern.permute.xlu0 0
    %995 = vperm.xlu0 %994, %v58
    %v996 = vpop.permute.xlu0 %995
    %998 = vset.pattern.permute.xlu0 0
    %999 = vperm.xlu0 %998, %v59
    %v1000 = vpop.permute.xlu0 %999
    %1002 = vset.pattern.permute.xlu0 0
    %1003 = vperm.xlu0 %1002, %v60
    %v1004 = vpop.permute.xlu0 %1003
    %1006 = vset.pattern.permute.xlu0 0
    %1007 = vperm.xlu0 %1006, %v61
    %v1008 = vpop.permute.xlu0 %1007
    %1010 = vset.pattern.permute.xlu0 0
    %1011 = vperm.xlu0 %1010, %v62
    %v1012 = vpop.permute.xlu0 %1011
    %1014 = vset.pattern.permute.xlu0 0
    %1015 = vperm.xlu0 %1014, %v63
    %v1016 = vpop.permute.xlu0 %1015
    %1018 = vset.pattern.permute.xlu0 0
    %1019 = vperm.xlu0 %1018, %v64
    %v1020 = vpop.permute.xlu0 %1019
    %1022 = vset.pattern.permute.xlu0 0
    %1023 = vperm.xlu0 %1022, %v65
    %v1024 = vpop.permute.xlu0 %1023
    %1026 = vset.pattern.permute.xlu0 0
    %1027 = vperm.xlu0 %1026, %v66
    %v1028 = vpop.permute.xlu0 %1027
    %1030 = vset.pattern.permute.xlu0 0
    %1031 = vperm.xlu0 %1030, %v67
    %v1032 = vpop.permute.xlu0 %1031
    %1034 = vset.pattern.permute.xlu0 0
    %1035 = vperm.xlu0 %1034, %v68
    %v1036 = vpop.permute.xlu0 %1035
    %1038 = vset.pattern.permute.xlu0 0
    %1039 = vperm.xlu0 %1038, %v69
    %v1040 = vpop.permute.xlu0 %1039
    %vm1041 = vcmask 1046528
    %v1042 = vrot.slane %v992, 1
    %v1043 = vrot.slane %v996, 1
    %v1044 = vsel %vm1041, %v1042, %v1043
    %v1045 = vrot.slane %v1000, 1
    %v1046 = vsel %vm1041, %v1043, %v1045
    %v1047 = vrot.slane %v1004, 1
    %v1048 = vsel %vm1041, %v1045, %v1047
    %v1049 = vrot.slane %v1008, 1
    %v1050 = vsel %vm1041, %v1047, %v1049
    %v1051 = vrot.slane %v1012, 1
    %v1052 = vsel %vm1041, %v1049, %v1051
    %v1053 = vrot.slane %v1016, 1
    %v1054 = vsel %vm1041, %v1051, %v1053
    %v1055 = vrot.slane %v1020, 1
    %v1056 = vsel %vm1041, %v1053, %v1055
    %v1057 = vrot.slane %v1024, 1
    %v1058 = vsel %vm1041, %v1055, %v1057
    %v1059 = vrot.slane %v1028, 1
    %v1060 = vsel %vm1041, %v1057, %v1059
    %v1061 = vrot.slane %v1032, 1
    %v1062 = vsel %vm1041, %v1059, %v1061
    %v1063 = vrot.slane %v1036, 1
    %v1064 = vsel %vm1041, %v1061, %v1063
    %v1065 = vrot.slane %v1040, 1
    %v1066 = vsel %vm1041, %v1063, %v1065
    %v1081 = vmul.f32 %v871, %v1042
    %v1082 = vmul.f32 %v872, %v1044
    %v1083 = vmul.f32 %v873, %v1046
    %v1084 = vmul.f32 %v874, %v1048
    %v1085 = vmul.f32 %v875, %v1050
    %v1086 = vmul.f32 %v876, %v1052
    %v1087 = vmul.f32 %v877, %v1054
    %v1088 = vmul.f32 %v878, %v1056
    %v1089 = vmul.f32 %v879, %v1058
    %v1090 = vmul.f32 %v880, %v1060
    %v1091 = vmul.f32 %v881, %v1062
    %v1092 = vmul.f32 %v882, %v1064
    %v1093 = vmul.f32 %v885, %v1066
    %v1094 = vmul.f32 %v1065, 0.0
    %1096 = vset.pattern.permute.xlu0 0
    %1097 = vperm.xlu0 %1096, %v71
    %v1098 = vpop.permute.xlu0 %1097
    %1101 = vset.pattern.permute.xlu0 0
    %1102 = vperm.xlu0 %1101, %v72
    %v1103 = vpop.permute.xlu0 %1102
    %1106 = vset.pattern.permute.xlu0 0
    %1107 = vperm.xlu0 %1106, %v73
    %v1108 = vpop.permute.xlu0 %1107
    %1111 = vset.pattern.permute.xlu0 0
    %1112 = vperm.xlu0 %1111, %v74
    %v1113 = vpop.permute.xlu0 %1112
    %1116 = vset.pattern.permute.xlu0 0
    %1117 = vperm.xlu0 %1116, %v75
    %v1118 = vpop.permute.xlu0 %1117
    %1121 = vset.pattern.permute.xlu0 0
    %1122 = vperm.xlu0 %1121, %v76
    %v1123 = vpop.permute.xlu0 %1122
    %1126 = vset.pattern.permute.xlu0 0
    %1127 = vperm.xlu0 %1126, %v77
    %v1128 = vpop.permute.xlu0 %1127
    %1131 = vset.pattern.permute.xlu0 0
    %1132 = vperm.xlu0 %1131, %v78
    %v1133 = vpop.permute.xlu0 %1132
    %1136 = vset.pattern.permute.xlu0 0
    %1137 = vperm.xlu0 %1136, %v79
    %v1138 = vpop.permute.xlu0 %1137
    %1141 = vset.pattern.permute.xlu0 0
    %1142 = vperm.xlu0 %1141, %v80
    %v1143 = vpop.permute.xlu0 %1142
    %1146 = vset.pattern.permute.xlu0 0
    %1147 = vperm.xlu0 %1146, %v81
    %v1148 = vpop.permute.xlu0 %1147
    %1151 = vset.pattern.permute.xlu0 0
    %1152 = vperm.xlu0 %1151, %v82
    %v1153 = vpop.permute.xlu0 %1152
    %1156 = vset.pattern.permute.xlu0 0
    %1157 = vperm.xlu0 %1156, %v83
    %v1158 = vpop.permute.xlu0 %1157
    %v1160 = vmul.f32 %v872, %v1098
    %v1161 = vmul.f32 %v873, %v1103
    %v1162 = vmul.f32 %v874, %v1108
    %v1163 = vmul.f32 %v875, %v1113
    %v1164 = vmul.f32 %v876, %v1118
    %v1165 = vmul.f32 %v877, %v1123
    %v1166 = vmul.f32 %v878, %v1128
    %v1167 = vmul.f32 %v879, %v1133
    %v1168 = vmul.f32 %v880, %v1138
    %v1169 = vmul.f32 %v881, %v1143
    %v1170 = vmul.f32 %v882, %v1148
    %v1171 = vmul.f32 %v885, %v1153
    %v1172 = vmul.f32 %v1158, 0.0
    %v1186 = vrot.slane %v976, 1
    %v1187 = vrot.slane %v977, 1
    %v1188 = vsel %vm1041, %v1186, %v1187
    %v1189 = vrot.slane %v978, 1
    %v1190 = vsel %vm1041, %v1187, %v1189
    %v1191 = vrot.slane %v979, 1
    %v1192 = vsel %vm1041, %v1189, %v1191
    %v1193 = vrot.slane %v980, 1
    %v1194 = vsel %vm1041, %v1191, %v1193
    %v1195 = vrot.slane %v981, 1
    %v1196 = vsel %vm1041, %v1193, %v1195
    %v1197 = vrot.slane %v982, 1
    %v1198 = vsel %vm1041, %v1195, %v1197
    %v1199 = vrot.slane %v983, 1
    %v1200 = vsel %vm1041, %v1197, %v1199
    %v1201 = vrot.slane %v984, 1
    %v1202 = vsel %vm1041, %v1199, %v1201
    %v1203 = vrot.slane %v985, 1
    %v1204 = vsel %vm1041, %v1201, %v1203
    %v1205 = vrot.slane %v986, 1
    %v1206 = vsel %vm1041, %v1203, %v1205
    %v1207 = vrot.slane %v987, 1
    %v1208 = vsel %vm1041, %v1205, %v1207
    %v1209 = vrot.slane %v988, 1
    %v1210 = vsel %vm1041, %v1207, %v1209
    %1211 = vrot.lane.b32.xlu0 %v1188, 64
    %v1212 = vpop.permute.xlu0 %1211
    %1213 = vrot.lane.b32.xlu0 %v1190, 64
    %v1214 = vpop.permute.xlu0 %1213
    %1215 = vrot.lane.b32.xlu0 %v1192, 64
    %v1216 = vpop.permute.xlu0 %1215
    %1217 = vrot.lane.b32.xlu0 %v1194, 64
    %v1218 = vpop.permute.xlu0 %1217
    %1219 = vrot.lane.b32.xlu0 %v1196, 64
    %v1220 = vpop.permute.xlu0 %1219
    %1221 = vrot.lane.b32.xlu0 %v1198, 64
    %v1222 = vpop.permute.xlu0 %1221
    %1223 = vrot.lane.b32.xlu0 %v1200, 64
    %v1224 = vpop.permute.xlu0 %1223
    %1225 = vrot.lane.b32.xlu0 %v1202, 64
    %v1226 = vpop.permute.xlu0 %1225
    %1227 = vrot.lane.b32.xlu0 %v1204, 64
    %v1228 = vpop.permute.xlu0 %1227
    %1229 = vrot.lane.b32.xlu0 %v1206, 64
    %v1230 = vpop.permute.xlu0 %1229
    %1231 = vrot.lane.b32.xlu0 %v1208, 64
    %v1232 = vpop.permute.xlu0 %1231
    %1233 = vrot.lane.b32.xlu0 %v1210, 64
    %v1234 = vpop.permute.xlu0 %1233
    %1235 = vrot.lane.b32.xlu0 %v1209, 64
    %v1236 = vpop.permute.xlu0 %1235
    %v1264 = vrot.slane %v1081, 7
    %v1265 = vrot.slane %v1082, 7
    %v1266 = vsel %vm849, %v1264, %v1265
    %v1267 = vrot.slane %v1083, 7
    %v1268 = vsel %vm849, %v1265, %v1267
    %v1269 = vrot.slane %v1084, 7
    %v1270 = vsel %vm849, %v1267, %v1269
    %v1271 = vrot.slane %v1085, 7
    %v1272 = vsel %vm849, %v1269, %v1271
    %v1273 = vrot.slane %v1086, 7
    %v1274 = vsel %vm849, %v1271, %v1273
    %v1275 = vrot.slane %v1087, 7
    %v1276 = vsel %vm849, %v1273, %v1275
    %v1277 = vrot.slane %v1088, 7
    %v1278 = vsel %vm849, %v1275, %v1277
    %v1279 = vrot.slane %v1089, 7
    %v1280 = vsel %vm849, %v1277, %v1279
    %v1281 = vrot.slane %v1090, 7
    %v1282 = vsel %vm849, %v1279, %v1281
    %v1283 = vrot.slane %v1091, 7
    %v1284 = vsel %vm849, %v1281, %v1283
    %v1285 = vrot.slane %v1092, 7
    %v1286 = vsel %vm849, %v1283, %v1285
    %v1287 = vrot.slane %v1093, 7
    %v1288 = vsel %vm849, %v1285, %v1287
    %v1289 = vrot.slane %v1094, 7
    %v1290 = vsel %vm849, %v1287, %v1289
    %1317 = vrot.lane.b32.xlu0 %v1160, 64
    %v1318 = vpop.permute.xlu0 %1317
    %1319 = vrot.lane.b32.xlu0 %v1161, 64
    %v1320 = vpop.permute.xlu0 %1319
    %1321 = vrot.lane.b32.xlu0 %v1162, 64
    %v1322 = vpop.permute.xlu0 %1321
    %1323 = vrot.lane.b32.xlu0 %v1163, 64
    %v1324 = vpop.permute.xlu0 %1323
    %1325 = vrot.lane.b32.xlu0 %v1164, 64
    %v1326 = vpop.permute.xlu0 %1325
    %1327 = vrot.lane.b32.xlu0 %v1165, 64
    %v1328 = vpop.permute.xlu0 %1327
    %1329 = vrot.lane.b32.xlu0 %v1166, 64
    %v1330 = vpop.permute.xlu0 %1329
    %1331 = vrot.lane.b32.xlu0 %v1167, 64
    %v1332 = vpop.permute.xlu0 %1331
    %1333 = vrot.lane.b32.xlu0 %v1168, 64
    %v1334 = vpop.permute.xlu0 %1333
    %1335 = vrot.lane.b32.xlu0 %v1169, 64
    %v1336 = vpop.permute.xlu0 %1335
    %1337 = vrot.lane.b32.xlu0 %v1170, 64
    %v1338 = vpop.permute.xlu0 %1337
    %1339 = vrot.lane.b32.xlu0 %v1171, 64
    %v1340 = vpop.permute.xlu0 %1339
    %1341 = vrot.lane.b32.xlu0 %v1172, 64
    %v1342 = vpop.permute.xlu0 %1341
    %vm1356 = vcmask 523264
    %v1357 = vsel %vm1356, %v871, %v1212
    %v1358 = vsel %vm1356, %v872, %v1214
    %v1359 = vsel %vm1356, %v873, %v1216
    %v1360 = vsel %vm1356, %v874, %v1218
    %v1361 = vsel %vm1356, %v875, %v1220
    %v1362 = vsel %vm1356, %v876, %v1222
    %v1363 = vsel %vm1356, %v877, %v1224
    %v1364 = vsel %vm1356, %v878, %v1226
    %v1365 = vsel %vm1356, %v879, %v1228
    %v1366 = vsel %vm1356, %v880, %v1230
    %v1367 = vsel %vm1356, %v881, %v1232
    %v1368 = vsel %vm1356, %v882, %v1234
    %v1369 = vsel %vm1356, %v883, %v1236
    %v1370 = vsel %vm1356, %v1266, %v1318
    %v1371 = vsel %vm1356, %v1268, %v1320
    %v1372 = vsel %vm1356, %v1270, %v1322
    %v1373 = vsel %vm1356, %v1272, %v1324
    %v1374 = vsel %vm1356, %v1274, %v1326
    %v1375 = vsel %vm1356, %v1276, %v1328
    %v1376 = vsel %vm1356, %v1278, %v1330
    %v1377 = vsel %vm1356, %v1280, %v1332
    %v1378 = vsel %vm1356, %v1282, %v1334
    %v1379 = vsel %vm1356, %v1284, %v1336
    %v1380 = vsel %vm1356, %v1286, %v1338
    %v1381 = vsel %vm1356, %v1288, %v1340
    %v1382 = vsel %vm1356, %v1290, %v1342
    %v1383 = vpack.c.bf16 %v1358, %v1357
    %v1384 = vpack.c.bf16 %v1371, %v1370
    %v1385 = vpack.c.bf16 %v1360, %v1359
    %v1386 = vpack.c.bf16 %v1373, %v1372
    %v1387 = vpack.c.bf16 %v1362, %v1361
    %v1388 = vpack.c.bf16 %v1375, %v1374
    %v1389 = vpack.c.bf16 %v1364, %v1363
    %v1390 = vpack.c.bf16 %v1377, %v1376
    %v1391 = vpack.c.bf16 %v1366, %v1365
    %v1392 = vpack.c.bf16 %v1379, %v1378
    %v1393 = vpack.c.bf16 %v1368, %v1367
    %v1394 = vpack.c.bf16 %v1381, %v1380
    %v1395 = vpack.c.bf16 %v1369, %v1369
    %v1396 = vpack.c.bf16 %v1382, %v1382
    %v1397 = vld [vmem:[%s4] sm:$0xf]
    %v1398 = vld [vmem:[%s4 + $0x4] sm:$0xf]
    %v1399 = vld [vmem:[%s4 + $0x8] sm:$0xf]
    %v1400 = vld [vmem:[%s4 + $0xc] sm:$0xf]
    %v1401 = vld [vmem:[%s4 + $0x10] sm:$0xf]
    %v1402 = vld [vmem:[%s4 + $0x14] sm:$0xf]
    %v1403 = vld [vmem:[%s4 + $0x18] sm:$0xf]
    %v1404 = vld [vmem:[%s4 + $0x1c] sm:$0xf]
    %v1405 = vld [vmem:[%s4 + $0x20] sm:$0xf]
    %v1406 = vld [vmem:[%s4 + $0x24] sm:$0xf]
    %v1407 = vld [vmem:[%s4 + $0x28] sm:$0xf]
    %v1408 = vld [vmem:[%s4 + $0x2c] sm:$0xf]
    %v1409 = vld [vmem:[%s4 + $0x30] sm:$0xf]
    %v1410 = vld [vmem:[%s4 + $0x34] sm:$0xf]
    %v1411 = vld [vmem:[%s4 + $0x38] sm:$0xf]
    %v1412 = vld [vmem:[%s4 + $0x3c] sm:$0xf]
    %v1413 = vld [vmem:[%s4 + $0x40] sm:$0xf]
    %v1414 = vld [vmem:[%s4 + $0x44] sm:$0xf]
    %v1415 = vld [vmem:[%s4 + $0x48] sm:$0xf]
    %v1416 = vld [vmem:[%s4 + $0x4c] sm:$0xf]
    %v1417 = vld [vmem:[%s4 + $0x50] sm:$0xf]
    %v1418 = vld [vmem:[%s4 + $0x54] sm:$0xf]
    %v1419 = vld [vmem:[%s4 + $0x58] sm:$0xf]
    %v1420 = vld [vmem:[%s4 + $0x5c] sm:$0xf]
    %v1421 = vld [vmem:[%s4 + $0x60] sm:$0xf]
    %v1422 = vld [vmem:[%s4 + $0x64] sm:$0xf]
    %v1423 = vld [vmem:[%s4 + $0x68] sm:$0xf]
    %v1424 = vld [vmem:[%s4 + $0x6c] sm:$0xf]
    %v1425 = vld [vmem:[%s4 + $0x70] sm:$0xf]
    %v1426 = vld [vmem:[%s4 + $0x74] sm:$0xf]
    %v1427 = vld [vmem:[%s4 + $0x78] sm:$0xf]
    %v1428 = vld [vmem:[%s4 + $0x7c] sm:$0xf]
    %v1429 = vld [vmem:[%s5] sm:$0x1]
    %v1431 = vlaneseq
    %v1432 = vshrl.u32 %v1431, 7
    %v1433 = vsub.s32 0, %v1432
    %v1434 = vrot.slane %v1429, %v1433
    %v1468 = vunpack.c.l.b16 %v1397
    %v1469 = vunpack.c.l.b16 %v1398
    %v1470 = vunpack.c.l.b16 %v1399
    %v1471 = vunpack.c.l.b16 %v1400
    %v1472 = vunpack.c.l.b16 %v1401
    %v1473 = vunpack.c.l.b16 %v1402
    %v1474 = vunpack.c.l.b16 %v1403
    %v1475 = vunpack.c.l.b16 %v1404
    %v1476 = vunpack.c.l.b16 %v1405
    %v1477 = vunpack.c.l.b16 %v1406
    %v1478 = vunpack.c.l.b16 %v1407
    %v1479 = vunpack.c.l.b16 %v1408
    %v1480 = vunpack.c.l.b16 %v1409
    %v1481 = vunpack.c.l.b16 %v1410
    %v1482 = vunpack.c.l.b16 %v1411
    %v1483 = vunpack.c.l.b16 %v1412
    %v1484 = vunpack.c.l.b16 %v1413
    %v1485 = vunpack.c.l.b16 %v1414
    %v1486 = vunpack.c.l.b16 %v1415
    %v1487 = vunpack.c.l.b16 %v1416
    %v1488 = vunpack.c.l.b16 %v1417
    %v1489 = vunpack.c.l.b16 %v1418
    %v1490 = vunpack.c.l.b16 %v1419
    %v1491 = vunpack.c.l.b16 %v1420
    %v1492 = vunpack.c.l.b16 %v1421
    %v1493 = vunpack.c.l.b16 %v1422
    %v1494 = vunpack.c.l.b16 %v1423
    %v1495 = vunpack.c.l.b16 %v1424
    %v1496 = vunpack.c.l.b16 %v1425
    %v1497 = vunpack.c.l.b16 %v1426
    %v1498 = vunpack.c.l.b16 %v1427
    %v1499 = vunpack.c.l.b16 %v1428
    %v1500 = vpack.c.b16 %v1469, %v1468
    %v1501 = vpack.c.b16 %v1471, %v1470
    %v1502 = vpack.c.b16 %v1473, %v1472
    %v1503 = vpack.c.b16 %v1475, %v1474
    %v1504 = vpack.c.b16 %v1477, %v1476
    %v1505 = vpack.c.b16 %v1479, %v1478
    %v1506 = vpack.c.b16 %v1481, %v1480
    %v1507 = vpack.c.b16 %v1483, %v1482
    %v1508 = vpack.c.b16 %v1485, %v1484
    %v1509 = vpack.c.b16 %v1487, %v1486
    %v1510 = vpack.c.b16 %v1489, %v1488
    %v1511 = vpack.c.b16 %v1491, %v1490
    %v1512 = vpack.c.b16 %v1493, %v1492
    %v1513 = vpack.c.b16 %v1495, %v1494
    %v1514 = vpack.c.b16 %v1497, %v1496
    %v1515 = vpack.c.b16 %v1499, %v1498
    %1532 = vmatprep.subr.bf16.mxu0 0
    %1533 = vmatpush1.bf16.msra.mxu0 %v1507
    %1534 = vmatprep.subr.bf16.mxu0 0
    %1535 = vmatpush1.bf16.msra.mxu0 %v1506
    %1536 = vmatprep.subr.bf16.mxu0 0
    %1537 = vmatpush1.bf16.msra.mxu0 %v1505
    %1538 = vmatprep.subr.bf16.mxu0 0
    %1539 = vmatpush1.bf16.msra.mxu0 %v1504
    %1540 = vmatprep.subr.bf16.mxu0 0
    %1541 = vmatpush1.bf16.msra.mxu0 %v1503
    %1542 = vmatprep.subr.bf16.mxu0 0
    %1543 = vmatpush1.bf16.msra.mxu0 %v1502
    %1544 = vmatprep.subr.bf16.mxu0 0
    %1545 = vmatpush1.bf16.msra.mxu0 %v1501
    %1546 = vmatprep.subr.bf16.mxu0 0
    %1547 = vmatpush1.bf16.msra.mxu0 %v1500
    %1548 = vmatprep.subr.bf16.mxu0 0
    %1549 = vmatpush2.bf16.msra.mxu0 %v1515
    %1550 = vmatprep.subr.bf16.mxu0 0
    %1551 = vmatpush2.bf16.msra.mxu0 %v1514
    %1552 = vmatprep.subr.bf16.mxu0 0
    %1553 = vmatpush2.bf16.msra.mxu0 %v1513
    %1554 = vmatprep.subr.bf16.mxu0 0
    %1555 = vmatpush2.bf16.msra.mxu0 %v1512
    %1556 = vmatprep.subr.bf16.mxu0 0
    %1557 = vmatpush2.bf16.msra.mxu0 %v1511
    %1558 = vmatprep.subr.bf16.mxu0 0
    %1559 = vmatpush2.bf16.msra.mxu0 %v1510
    %1560 = vmatprep.subr.bf16.mxu0 0
    %1561 = vmatpush2.bf16.msra.mxu0 %v1509
    %1562 = vmatprep.subr.bf16.mxu0 0
    %1563 = vmatpush2.bf16.msra.mxu0 %v1508
    %1564 = vmatprep.mubr.bf16.mxu0 %v1384
    %1565 = vmatmul.mubr.bf16.gmra.mxu0 %v1383
    %v1566 = vpop.f32.mrf.mxu0
    %v1567 = vadd.f32 %v1434, %v1566
    %v1568 = vpop.f32.mrf.mxu0
    %v1569 = vpop.f32.mrf.mxu0
    %v1570 = vadd.f32 %v1434, %v1569
    %v1571 = vpop.f32.mrf.mxu0
    %1572 = vmatprep.mubr.bf16.mxu0 %v1386
    %1573 = vmatmul.mubr.bf16.gmra.mxu0 %v1385
    %v1574 = vpop.f32.mrf.mxu0
    %v1575 = vadd.f32 %v1434, %v1574
    %v1576 = vpop.f32.mrf.mxu0
    %v1577 = vpop.f32.mrf.mxu0
    %v1578 = vadd.f32 %v1434, %v1577
    %v1579 = vpop.f32.mrf.mxu0
    %1580 = vmatprep.mubr.bf16.mxu0 %v1388
    %1581 = vmatmul.mubr.bf16.gmra.mxu0 %v1387
    %v1582 = vpop.f32.mrf.mxu0
    %v1583 = vadd.f32 %v1434, %v1582
    %v1584 = vpop.f32.mrf.mxu0
    %v1585 = vpop.f32.mrf.mxu0
    %v1586 = vadd.f32 %v1434, %v1585
    %v1587 = vpop.f32.mrf.mxu0
    %1588 = vmatprep.mubr.bf16.mxu0 %v1390
    %1589 = vmatmul.mubr.bf16.gmra.mxu0 %v1389
    %v1590 = vpop.f32.mrf.mxu0
    %v1591 = vadd.f32 %v1434, %v1590
    %v1592 = vpop.f32.mrf.mxu0
    %v1593 = vpop.f32.mrf.mxu0
    %v1594 = vadd.f32 %v1434, %v1593
    %v1595 = vpop.f32.mrf.mxu0
    %1596 = vmatprep.mubr.bf16.mxu0 %v1392
    %1597 = vmatmul.mubr.bf16.gmra.mxu0 %v1391
    %v1598 = vpop.f32.mrf.mxu0
    %v1599 = vadd.f32 %v1434, %v1598
    %v1600 = vpop.f32.mrf.mxu0
    %v1601 = vpop.f32.mrf.mxu0
    %v1602 = vadd.f32 %v1434, %v1601
    %v1603 = vpop.f32.mrf.mxu0
    %1604 = vmatprep.mubr.bf16.mxu0 %v1394
    %1605 = vmatmul.mubr.bf16.gmra.mxu0 %v1393
    %v1606 = vpop.f32.mrf.mxu0
    %v1607 = vadd.f32 %v1434, %v1606
    %v1608 = vpop.f32.mrf.mxu0
    %v1609 = vpop.f32.mrf.mxu0
    %v1610 = vadd.f32 %v1434, %v1609
    %v1611 = vpop.f32.mrf.mxu0
    %1612 = vmatprep.mubr.bf16.mxu0 %v1396
    %1613 = vmatmul.mubr.bf16.gmra.mxu0 %v1395
    %v1614 = vpop.f32.mrf.mxu0
    %v1615 = vadd.f32 %v1434, %v1614
    %v1616 = vpop.f32.mrf.mxu0
    %v1617 = vpop.f32.mrf.mxu0
    %v1618 = vpop.f32.mrf.mxu0
    %1619 = vdwg.mxu0
    %v1620 = vmax.f32 %v1567, 0.0
    %v1621 = vmax.f32 %v1570, 0.0
    %v1622 = vmax.f32 %v1575, 0.0
    %v1623 = vmax.f32 %v1578, 0.0
    %v1624 = vmax.f32 %v1583, 0.0
    %v1625 = vmax.f32 %v1586, 0.0
    %v1626 = vmax.f32 %v1591, 0.0
    %v1627 = vmax.f32 %v1594, 0.0
    %v1628 = vmax.f32 %v1599, 0.0
    %v1629 = vmax.f32 %v1602, 0.0
    %v1630 = vmax.f32 %v1607, 0.0
    %v1631 = vmax.f32 %v1610, 0.0
    %v1632 = vmax.f32 %v1615, 0.0
    %v1633 = vsel %vm884, %v1632, 0.0
    %v1634 = vmul.f32 %v1620, %v938
    %v1635 = vmul.f32 %v1621, %v940
    %v1636 = vmul.f32 %v1622, %v942
    %v1637 = vmul.f32 %v1623, %v944
    %v1638 = vmul.f32 %v1624, %v946
    %v1639 = vmul.f32 %v1625, %v948
    %v1640 = vmul.f32 %v1626, %v950
    %v1641 = vmul.f32 %v1627, %v952
    %v1642 = vmul.f32 %v1628, %v954
    %v1643 = vmul.f32 %v1629, %v956
    %v1644 = vmul.f32 %v1630, %v958
    %v1645 = vmul.f32 %v1631, %v960
    %v1646 = vmul.f32 %v1633, %v962
    %v1647 = vmul.f32 %v1620, %v1042
    %v1648 = vmul.f32 %v1621, %v1044
    %v1649 = vmul.f32 %v1622, %v1046
    %v1650 = vmul.f32 %v1623, %v1048
    %v1651 = vmul.f32 %v1624, %v1050
    %v1652 = vmul.f32 %v1625, %v1052
    %v1653 = vmul.f32 %v1626, %v1054
    %v1654 = vmul.f32 %v1627, %v1056
    %v1655 = vmul.f32 %v1628, %v1058
    %v1656 = vmul.f32 %v1629, %v1060
    %v1657 = vmul.f32 %v1630, %v1062
    %v1658 = vmul.f32 %v1631, %v1064
    %v1659 = vmul.f32 %v1633, %v1066
    %v1660 = vmul.f32 %v1621, %v1098
    %v1661 = vmul.f32 %v1622, %v1103
    %v1662 = vmul.f32 %v1623, %v1108
    %v1663 = vmul.f32 %v1624, %v1113
    %v1664 = vmul.f32 %v1625, %v1118
    %v1665 = vmul.f32 %v1626, %v1123
    %v1666 = vmul.f32 %v1627, %v1128
    %v1667 = vmul.f32 %v1628, %v1133
    %v1668 = vmul.f32 %v1629, %v1138
    %v1669 = vmul.f32 %v1630, %v1143
    %v1670 = vmul.f32 %v1631, %v1148
    %v1671 = vmul.f32 %v1633, %v1153
    %v1685 = vrot.slane %v1634, 1
    %v1686 = vrot.slane %v1635, 1
    %v1687 = vsel %vm1041, %v1685, %v1686
    %v1688 = vrot.slane %v1636, 1
    %v1689 = vsel %vm1041, %v1686, %v1688
    %v1690 = vrot.slane %v1637, 1
    %v1691 = vsel %vm1041, %v1688, %v1690
    %v1692 = vrot.slane %v1638, 1
    %v1693 = vsel %vm1041, %v1690, %v1692
    %v1694 = vrot.slane %v1639, 1
    %v1695 = vsel %vm1041, %v1692, %v1694
    %v1696 = vrot.slane %v1640, 1
    %v1697 = vsel %vm1041, %v1694, %v1696
    %v1698 = vrot.slane %v1641, 1
    %v1699 = vsel %vm1041, %v1696, %v1698
    %v1700 = vrot.slane %v1642, 1
    %v1701 = vsel %vm1041, %v1698, %v1700
    %v1702 = vrot.slane %v1643, 1
    %v1703 = vsel %vm1041, %v1700, %v1702
    %v1704 = vrot.slane %v1644, 1
    %v1705 = vsel %vm1041, %v1702, %v1704
    %v1706 = vrot.slane %v1645, 1
    %v1707 = vsel %vm1041, %v1704, %v1706
    %v1708 = vrot.slane %v1646, 1
    %v1709 = vsel %vm1041, %v1706, %v1708
    %v1736 = vrot.slane %v1647, 7
    %v1737 = vrot.slane %v1648, 7
    %v1738 = vsel %vm849, %v1736, %v1737
    %v1739 = vrot.slane %v1649, 7
    %v1740 = vsel %vm849, %v1737, %v1739
    %v1741 = vrot.slane %v1650, 7
    %v1742 = vsel %vm849, %v1739, %v1741
    %v1743 = vrot.slane %v1651, 7
    %v1744 = vsel %vm849, %v1741, %v1743
    %v1745 = vrot.slane %v1652, 7
    %v1746 = vsel %vm849, %v1743, %v1745
    %v1747 = vrot.slane %v1653, 7
    %v1748 = vsel %vm849, %v1745, %v1747
    %v1749 = vrot.slane %v1654, 7
    %v1750 = vsel %vm849, %v1747, %v1749
    %v1751 = vrot.slane %v1655, 7
    %v1752 = vsel %vm849, %v1749, %v1751
    %v1753 = vrot.slane %v1656, 7
    %v1754 = vsel %vm849, %v1751, %v1753
    %v1755 = vrot.slane %v1657, 7
    %v1756 = vsel %vm849, %v1753, %v1755
    %v1757 = vrot.slane %v1658, 7
    %v1758 = vsel %vm849, %v1755, %v1757
    %v1759 = vrot.slane %v1659, 7
    %v1760 = vsel %vm849, %v1757, %v1759
    %v1761 = vsel %vm849, %v1759, %v1289
    %v1775 = vpack.c.bf16 %v1621, %v1620
    %v1776 = vpack.c.bf16 %v1689, %v1687
    %v1777 = vpack.c.bf16 %v1740, %v1738
    %v1778 = vpack.c.bf16 %v1661, %v1660
    %v1779 = vpack.c.bf16 %v1623, %v1622
    %v1780 = vpack.c.bf16 %v1693, %v1691
    %v1781 = vpack.c.bf16 %v1744, %v1742
    %v1782 = vpack.c.bf16 %v1663, %v1662
    %v1783 = vpack.c.bf16 %v1625, %v1624
    %v1784 = vpack.c.bf16 %v1697, %v1695
    %v1785 = vpack.c.bf16 %v1748, %v1746
    %v1786 = vpack.c.bf16 %v1665, %v1664
    %v1787 = vpack.c.bf16 %v1627, %v1626
    %v1788 = vpack.c.bf16 %v1701, %v1699
    %v1789 = vpack.c.bf16 %v1752, %v1750
    %v1790 = vpack.c.bf16 %v1667, %v1666
    %v1791 = vpack.c.bf16 %v1629, %v1628
    %v1792 = vpack.c.bf16 %v1705, %v1703
    %v1793 = vpack.c.bf16 %v1756, %v1754
    %v1794 = vpack.c.bf16 %v1669, %v1668
    %v1795 = vpack.c.bf16 %v1631, %v1630
    %v1796 = vpack.c.bf16 %v1709, %v1707
    %v1797 = vpack.c.bf16 %v1760, %v1758
    %v1798 = vpack.c.bf16 %v1671, %v1670
    %v1799 = vpack.c.bf16 %v1632, %v1632
    %v1800 = vpack.c.bf16 %v1708, %v1708
    %v1801 = vpack.c.bf16 %v1761, %v1761
    %v1802 = vpack.c.bf16 %v1172, %v1172
    %v1803 = vld [vmem:[%s6] sm:$0xf]
    %v1804 = vld [vmem:[%s6 + $0x4] sm:$0xf]
    %v1805 = vld [vmem:[%s6 + $0x8] sm:$0xf]
    %v1806 = vld [vmem:[%s6 + $0xc] sm:$0xf]
    %v1807 = vld [vmem:[%s6 + $0x10] sm:$0xf]
    %v1808 = vld [vmem:[%s6 + $0x14] sm:$0xf]
    %v1809 = vld [vmem:[%s6 + $0x18] sm:$0xf]
    %v1810 = vld [vmem:[%s6 + $0x1c] sm:$0xf]
    %v1811 = vld [vmem:[%s6 + $0x20] sm:$0xf]
    %v1812 = vld [vmem:[%s6 + $0x24] sm:$0xf]
    %v1813 = vld [vmem:[%s6 + $0x28] sm:$0xf]
    %v1814 = vld [vmem:[%s6 + $0x2c] sm:$0xf]
    %v1815 = vld [vmem:[%s6 + $0x30] sm:$0xf]
    %v1816 = vld [vmem:[%s6 + $0x34] sm:$0xf]
    %v1817 = vld [vmem:[%s6 + $0x38] sm:$0xf]
    %v1818 = vld [vmem:[%s6 + $0x3c] sm:$0xf]
    %v1819 = vld [vmem:[%s6 + $0x40] sm:$0xf]
    %v1820 = vld [vmem:[%s6 + $0x44] sm:$0xf]
    %v1821 = vld [vmem:[%s6 + $0x48] sm:$0xf]
    %v1822 = vld [vmem:[%s6 + $0x4c] sm:$0xf]
    %v1823 = vld [vmem:[%s6 + $0x50] sm:$0xf]
    %v1824 = vld [vmem:[%s6 + $0x54] sm:$0xf]
    %v1825 = vld [vmem:[%s6 + $0x58] sm:$0xf]
    %v1826 = vld [vmem:[%s6 + $0x5c] sm:$0xf]
    %v1827 = vld [vmem:[%s6 + $0x60] sm:$0xf]
    %v1828 = vld [vmem:[%s6 + $0x64] sm:$0xf]
    %v1829 = vld [vmem:[%s6 + $0x68] sm:$0xf]
    %v1830 = vld [vmem:[%s6 + $0x6c] sm:$0xf]
    %v1831 = vld [vmem:[%s6 + $0x70] sm:$0xf]
    %v1832 = vld [vmem:[%s6 + $0x74] sm:$0xf]
    %v1833 = vld [vmem:[%s6 + $0x78] sm:$0xf]
    %v1834 = vld [vmem:[%s6 + $0x7c] sm:$0xf]
    %v1835 = vld [vmem:[%s6 + $0x80] sm:$0xf]
    %v1836 = vld [vmem:[%s6 + $0x84] sm:$0xf]
    %v1837 = vld [vmem:[%s6 + $0x88] sm:$0xf]
    %v1838 = vld [vmem:[%s6 + $0x8c] sm:$0xf]
    %v1839 = vld [vmem:[%s6 + $0x90] sm:$0xf]
    %v1840 = vld [vmem:[%s6 + $0x94] sm:$0xf]
    %v1841 = vld [vmem:[%s6 + $0x98] sm:$0xf]
    %v1842 = vld [vmem:[%s6 + $0x9c] sm:$0xf]
    %v1843 = vld [vmem:[%s6 + $0xa0] sm:$0xf]
    %v1844 = vld [vmem:[%s6 + $0xa4] sm:$0xf]
    %v1845 = vld [vmem:[%s6 + $0xa8] sm:$0xf]
    %v1846 = vld [vmem:[%s6 + $0xac] sm:$0xf]
    %v1847 = vld [vmem:[%s6 + $0xb0] sm:$0xf]
    %v1848 = vld [vmem:[%s6 + $0xb4] sm:$0xf]
    %v1849 = vld [vmem:[%s6 + $0xb8] sm:$0xf]
    %v1850 = vld [vmem:[%s6 + $0xbc] sm:$0xf]
    %v1851 = vld [vmem:[%s6 + $0xc0] sm:$0xf]
    %v1852 = vld [vmem:[%s6 + $0xc4] sm:$0xf]
    %v1853 = vld [vmem:[%s6 + $0xc8] sm:$0xf]
    %v1854 = vld [vmem:[%s6 + $0xcc] sm:$0xf]
    %v1855 = vld [vmem:[%s6 + $0xd0] sm:$0xf]
    %v1856 = vld [vmem:[%s6 + $0xd4] sm:$0xf]
    %v1857 = vld [vmem:[%s6 + $0xd8] sm:$0xf]
    %v1858 = vld [vmem:[%s6 + $0xdc] sm:$0xf]
    %v1859 = vld [vmem:[%s6 + $0xe0] sm:$0xf]
    %v1860 = vld [vmem:[%s6 + $0xe4] sm:$0xf]
    %v1861 = vld [vmem:[%s6 + $0xe8] sm:$0xf]
    %v1862 = vld [vmem:[%s6 + $0xec] sm:$0xf]
    %v1863 = vld [vmem:[%s6 + $0xf0] sm:$0xf]
    %v1864 = vld [vmem:[%s6 + $0xf4] sm:$0xf]
    %v1865 = vld [vmem:[%s6 + $0xf8] sm:$0xf]
    %v1866 = vld [vmem:[%s6 + $0xfc] sm:$0xf]
    %v1867 = vld [vmem:[%s7] sm:$0x1]
    %v1869 = vlaneseq
    %v1870 = vshrl.u32 %v1869, 7
    %v1871 = vsub.s32 0, %v1870
    %v1872 = vrot.slane %v1867, %v1871
    %v1938 = vunpack.c.l.b16 %v1803
    %v1939 = vunpack.c.l.b16 %v1804
    %v1940 = vunpack.c.l.b16 %v1805
    %v1941 = vunpack.c.l.b16 %v1806
    %v1942 = vunpack.c.l.b16 %v1807
    %v1943 = vunpack.c.l.b16 %v1808
    %v1944 = vunpack.c.l.b16 %v1809
    %v1945 = vunpack.c.l.b16 %v1810
    %v1946 = vunpack.c.l.b16 %v1811
    %v1947 = vunpack.c.l.b16 %v1812
    %v1948 = vunpack.c.l.b16 %v1813
    %v1949 = vunpack.c.l.b16 %v1814
    %v1950 = vunpack.c.l.b16 %v1815
    %v1951 = vunpack.c.l.b16 %v1816
    %v1952 = vunpack.c.l.b16 %v1817
    %v1953 = vunpack.c.l.b16 %v1818
    %v1954 = vunpack.c.l.b16 %v1819
    %v1955 = vunpack.c.l.b16 %v1820
    %v1956 = vunpack.c.l.b16 %v1821
    %v1957 = vunpack.c.l.b16 %v1822
    %v1958 = vunpack.c.l.b16 %v1823
    %v1959 = vunpack.c.l.b16 %v1824
    %v1960 = vunpack.c.l.b16 %v1825
    %v1961 = vunpack.c.l.b16 %v1826
    %v1962 = vunpack.c.l.b16 %v1827
    %v1963 = vunpack.c.l.b16 %v1828
    %v1964 = vunpack.c.l.b16 %v1829
    %v1965 = vunpack.c.l.b16 %v1830
    %v1966 = vunpack.c.l.b16 %v1831
    %v1967 = vunpack.c.l.b16 %v1832
    %v1968 = vunpack.c.l.b16 %v1833
    %v1969 = vunpack.c.l.b16 %v1834
    %v1970 = vunpack.c.l.b16 %v1835
    %v1971 = vunpack.c.l.b16 %v1836
    %v1972 = vunpack.c.l.b16 %v1837
    %v1973 = vunpack.c.l.b16 %v1838
    %v1974 = vunpack.c.l.b16 %v1839
    %v1975 = vunpack.c.l.b16 %v1840
    %v1976 = vunpack.c.l.b16 %v1841
    %v1977 = vunpack.c.l.b16 %v1842
    %v1978 = vunpack.c.l.b16 %v1843
    %v1979 = vunpack.c.l.b16 %v1844
    %v1980 = vunpack.c.l.b16 %v1845
    %v1981 = vunpack.c.l.b16 %v1846
    %v1982 = vunpack.c.l.b16 %v1847
    %v1983 = vunpack.c.l.b16 %v1848
    %v1984 = vunpack.c.l.b16 %v1849
    %v1985 = vunpack.c.l.b16 %v1850
    %v1986 = vunpack.c.l.b16 %v1851
    %v1987 = vunpack.c.l.b16 %v1852
    %v1988 = vunpack.c.l.b16 %v1853
    %v1989 = vunpack.c.l.b16 %v1854
    %v1990 = vunpack.c.l.b16 %v1855
    %v1991 = vunpack.c.l.b16 %v1856
    %v1992 = vunpack.c.l.b16 %v1857
    %v1993 = vunpack.c.l.b16 %v1858
    %v1994 = vunpack.c.l.b16 %v1859
    %v1995 = vunpack.c.l.b16 %v1860
    %v1996 = vunpack.c.l.b16 %v1861
    %v1997 = vunpack.c.l.b16 %v1862
    %v1998 = vunpack.c.l.b16 %v1863
    %v1999 = vunpack.c.l.b16 %v1864
    %v2000 = vunpack.c.l.b16 %v1865
    %v2001 = vunpack.c.l.b16 %v1866
    %v2002 = vpack.c.b16 %v1939, %v1938
    %v2003 = vpack.c.b16 %v1941, %v1940
    %v2004 = vpack.c.b16 %v1943, %v1942
    %v2005 = vpack.c.b16 %v1945, %v1944
    %v2006 = vpack.c.b16 %v1947, %v1946
    %v2007 = vpack.c.b16 %v1949, %v1948
    %v2008 = vpack.c.b16 %v1951, %v1950
    %v2009 = vpack.c.b16 %v1953, %v1952
    %v2010 = vpack.c.b16 %v1955, %v1954
    %v2011 = vpack.c.b16 %v1957, %v1956
    %v2012 = vpack.c.b16 %v1959, %v1958
    %v2013 = vpack.c.b16 %v1961, %v1960
    %v2014 = vpack.c.b16 %v1963, %v1962
    %v2015 = vpack.c.b16 %v1965, %v1964
    %v2016 = vpack.c.b16 %v1967, %v1966
    %v2017 = vpack.c.b16 %v1969, %v1968
    %v2018 = vpack.c.b16 %v1971, %v1970
    %v2019 = vpack.c.b16 %v1973, %v1972
    %v2020 = vpack.c.b16 %v1975, %v1974
    %v2021 = vpack.c.b16 %v1977, %v1976
    %v2022 = vpack.c.b16 %v1979, %v1978
    %v2023 = vpack.c.b16 %v1981, %v1980
    %v2024 = vpack.c.b16 %v1983, %v1982
    %v2025 = vpack.c.b16 %v1985, %v1984
    %v2026 = vpack.c.b16 %v1987, %v1986
    %v2027 = vpack.c.b16 %v1989, %v1988
    %v2028 = vpack.c.b16 %v1991, %v1990
    %v2029 = vpack.c.b16 %v1993, %v1992
    %v2030 = vpack.c.b16 %v1995, %v1994
    %v2031 = vpack.c.b16 %v1997, %v1996
    %v2032 = vpack.c.b16 %v1999, %v1998
    %v2033 = vpack.c.b16 %v2001, %v2000
    %2066 = vmatprep.subr.bf16.mxu0 0
    %2067 = vmatpush1.bf16.msra.mxu0 %v2009
    %2068 = vmatprep.subr.bf16.mxu0 0
    %2069 = vmatpush1.bf16.msra.mxu0 %v2008
    %2070 = vmatprep.subr.bf16.mxu0 0
    %2071 = vmatpush1.bf16.msra.mxu0 %v2007
    %2072 = vmatprep.subr.bf16.mxu0 0
    %2073 = vmatpush1.bf16.msra.mxu0 %v2006
    %2074 = vmatprep.subr.bf16.mxu0 0
    %2075 = vmatpush1.bf16.msra.mxu0 %v2005
    %2076 = vmatprep.subr.bf16.mxu0 0
    %2077 = vmatpush1.bf16.msra.mxu0 %v2004
    %2078 = vmatprep.subr.bf16.mxu0 0
    %2079 = vmatpush1.bf16.msra.mxu0 %v2003
    %2080 = vmatprep.subr.bf16.mxu0 0
    %2081 = vmatpush1.bf16.msra.mxu0 %v2002
    %2082 = vmatprep.subr.bf16.mxu0 0
    %2083 = vmatpush2.bf16.msra.mxu0 %v2017
    %2084 = vmatprep.subr.bf16.mxu0 0
    %2085 = vmatpush2.bf16.msra.mxu0 %v2016
    %2086 = vmatprep.subr.bf16.mxu0 0
    %2087 = vmatpush2.bf16.msra.mxu0 %v2015
    %2088 = vmatprep.subr.bf16.mxu0 0
    %2089 = vmatpush2.bf16.msra.mxu0 %v2014
    %2090 = vmatprep.subr.bf16.mxu0 0
    %2091 = vmatpush2.bf16.msra.mxu0 %v2013
    %2092 = vmatprep.subr.bf16.mxu0 0
    %2093 = vmatpush2.bf16.msra.mxu0 %v2012
    %2094 = vmatprep.subr.bf16.mxu0 0
    %2095 = vmatpush2.bf16.msra.mxu0 %v2011
    %2096 = vmatprep.subr.bf16.mxu0 0
    %2097 = vmatpush2.bf16.msra.mxu0 %v2010
    %2098 = vmatprep.mubr.bf16.mxu0 %v1776
    %2099 = vmatmul.mubr.bf16.gmra.mxu0 %v1775
    %v2100 = vpop.f32.mrf.mxu0
    %v2101 = vadd.f32 %v1872, %v2100
    %v2102 = vpop.f32.mrf.mxu0
    %v2103 = vpop.f32.mrf.mxu0
    %v2104 = vadd.f32 %v1872, %v2103
    %v2105 = vpop.f32.mrf.mxu0
    %2106 = vmatprep.mubr.bf16.mxu0 %v1780
    %2107 = vmatmul.mubr.bf16.gmra.mxu0 %v1779
    %v2108 = vpop.f32.mrf.mxu0
    %v2109 = vadd.f32 %v1872, %v2108
    %v2110 = vpop.f32.mrf.mxu0
    %v2111 = vpop.f32.mrf.mxu0
    %v2112 = vadd.f32 %v1872, %v2111
    %v2113 = vpop.f32.mrf.mxu0
    %2114 = vmatprep.mubr.bf16.mxu0 %v1784
    %2115 = vmatmul.mubr.bf16.gmra.mxu0 %v1783
    %v2116 = vpop.f32.mrf.mxu0
    %v2117 = vadd.f32 %v1872, %v2116
    %v2118 = vpop.f32.mrf.mxu0
    %v2119 = vpop.f32.mrf.mxu0
    %v2120 = vadd.f32 %v1872, %v2119
    %v2121 = vpop.f32.mrf.mxu0
    %2122 = vmatprep.mubr.bf16.mxu0 %v1788
    %2123 = vmatmul.mubr.bf16.gmra.mxu0 %v1787
    %v2124 = vpop.f32.mrf.mxu0
    %v2125 = vadd.f32 %v1872, %v2124
    %v2126 = vpop.f32.mrf.mxu0
    %v2127 = vpop.f32.mrf.mxu0
    %v2128 = vadd.f32 %v1872, %v2127
    %v2129 = vpop.f32.mrf.mxu0
    %2130 = vmatprep.mubr.bf16.mxu0 %v1792
    %2131 = vmatmul.mubr.bf16.gmra.mxu0 %v1791
    %v2132 = vpop.f32.mrf.mxu0
    %v2133 = vadd.f32 %v1872, %v2132
    %v2134 = vpop.f32.mrf.mxu0
    %v2135 = vpop.f32.mrf.mxu0
    %v2136 = vadd.f32 %v1872, %v2135
    %v2137 = vpop.f32.mrf.mxu0
    %2138 = vmatprep.mubr.bf16.mxu0 %v1796
    %2139 = vmatmul.mubr.bf16.gmra.mxu0 %v1795
    %v2140 = vpop.f32.mrf.mxu0
    %v2141 = vadd.f32 %v1872, %v2140
    %v2142 = vpop.f32.mrf.mxu0
    %v2143 = vpop.f32.mrf.mxu0
    %v2144 = vadd.f32 %v1872, %v2143
    %v2145 = vpop.f32.mrf.mxu0
    %2146 = vmatprep.mubr.bf16.mxu0 %v1800
    %2147 = vmatmul.mubr.bf16.gmra.mxu0 %v1799
    %v2148 = vpop.f32.mrf.mxu0
    %v2149 = vadd.f32 %v1872, %v2148
    %v2150 = vpop.f32.mrf.mxu0
    %v2151 = vpop.f32.mrf.mxu0
    %v2152 = vpop.f32.mrf.mxu0
    %2153 = vdwg.mxu0
    %2154 = vmatprep.subr.bf16.mxu0 0
    %2155 = vmatpush1.bf16.msra.mxu0 %v2025
    %2156 = vmatprep.subr.bf16.mxu0 0
    %2157 = vmatpush1.bf16.msra.mxu0 %v2024
    %2158 = vmatprep.subr.bf16.mxu0 0
    %2159 = vmatpush1.bf16.msra.mxu0 %v2023
    %2160 = vmatprep.subr.bf16.mxu0 0
    %2161 = vmatpush1.bf16.msra.mxu0 %v2022
    %2162 = vmatprep.subr.bf16.mxu0 0
    %2163 = vmatpush1.bf16.msra.mxu0 %v2021
    %2164 = vmatprep.subr.bf16.mxu0 0
    %2165 = vmatpush1.bf16.msra.mxu0 %v2020
    %2166 = vmatprep.subr.bf16.mxu0 0
    %2167 = vmatpush1.bf16.msra.mxu0 %v2019
    %2168 = vmatprep.subr.bf16.mxu0 0
    %2169 = vmatpush1.bf16.msra.mxu0 %v2018
    %2170 = vmatprep.subr.bf16.mxu0 0
    %2171 = vmatpush2.bf16.msra.mxu0 %v2033
    %2172 = vmatprep.subr.bf16.mxu0 0
    %2173 = vmatpush2.bf16.msra.mxu0 %v2032
    %2174 = vmatprep.subr.bf16.mxu0 0
    %2175 = vmatpush2.bf16.msra.mxu0 %v2031
    %2176 = vmatprep.subr.bf16.mxu0 0
    %2177 = vmatpush2.bf16.msra.mxu0 %v2030
    %2178 = vmatprep.subr.bf16.mxu0 0
    %2179 = vmatpush2.bf16.msra.mxu0 %v2029
    %2180 = vmatprep.subr.bf16.mxu0 0
    %2181 = vmatpush2.bf16.msra.mxu0 %v2028
    %2182 = vmatprep.subr.bf16.mxu0 0
    %2183 = vmatpush2.bf16.msra.mxu0 %v2027
    %2184 = vmatprep.subr.bf16.mxu0 0
    %2185 = vmatpush2.bf16.msra.mxu0 %v2026
    %2186 = vmatprep.mubr.bf16.mxu0 %v1778
    %2187 = vmatmul.mubr.bf16.gmra.mxu0 %v1777
    %v2188 = vpop.f32.mrf.mxu0
    %v2189 = vadd.f32 %v2101, %v2188
    %v2190 = vpop.f32.mrf.mxu0
    %v2191 = vpop.f32.mrf.mxu0
    %v2192 = vadd.f32 %v2104, %v2191
    %v2193 = vpop.f32.mrf.mxu0
    %2194 = vmatprep.mubr.bf16.mxu0 %v1782
    %2195 = vmatmul.mubr.bf16.gmra.mxu0 %v1781
    %v2196 = vpop.f32.mrf.mxu0
    %v2197 = vadd.f32 %v2109, %v2196
    %v2198 = vpop.f32.mrf.mxu0
    %v2199 = vpop.f32.mrf.mxu0
    %v2200 = vadd.f32 %v2112, %v2199
    %v2201 = vpop.f32.mrf.mxu0
    %2202 = vmatprep.mubr.bf16.mxu0 %v1786
    %2203 = vmatmul.mubr.bf16.gmra.mxu0 %v1785
    %v2204 = vpop.f32.mrf.mxu0
    %v2205 = vadd.f32 %v2117, %v2204
    %v2206 = vpop.f32.mrf.mxu0
    %v2207 = vpop.f32.mrf.mxu0
    %v2208 = vadd.f32 %v2120, %v2207
    %v2209 = vpop.f32.mrf.mxu0
    %2210 = vmatprep.mubr.bf16.mxu0 %v1790
    %2211 = vmatmul.mubr.bf16.gmra.mxu0 %v1789
    %v2212 = vpop.f32.mrf.mxu0
    %v2213 = vadd.f32 %v2125, %v2212
    %v2214 = vpop.f32.mrf.mxu0
    %v2215 = vpop.f32.mrf.mxu0
    %v2216 = vadd.f32 %v2128, %v2215
    %v2217 = vpop.f32.mrf.mxu0
    %2218 = vmatprep.mubr.bf16.mxu0 %v1794
    %2219 = vmatmul.mubr.bf16.gmra.mxu0 %v1793
    %v2220 = vpop.f32.mrf.mxu0
    %v2221 = vadd.f32 %v2133, %v2220
    %v2222 = vpop.f32.mrf.mxu0
    %v2223 = vpop.f32.mrf.mxu0
    %v2224 = vadd.f32 %v2136, %v2223
    %v2225 = vpop.f32.mrf.mxu0
    %2226 = vmatprep.mubr.bf16.mxu0 %v1798
    %2227 = vmatmul.mubr.bf16.gmra.mxu0 %v1797
    %v2228 = vpop.f32.mrf.mxu0
    %v2229 = vadd.f32 %v2141, %v2228
    %v2230 = vpop.f32.mrf.mxu0
    %v2231 = vpop.f32.mrf.mxu0
    %v2232 = vadd.f32 %v2144, %v2231
    %v2233 = vpop.f32.mrf.mxu0
    %2234 = vmatprep.mubr.bf16.mxu0 %v1802
    %2235 = vmatmul.mubr.bf16.gmra.mxu0 %v1801
    %v2236 = vpop.f32.mrf.mxu0
    %v2237 = vadd.f32 %v2149, %v2236
    %v2238 = vpop.f32.mrf.mxu0
    %v2239 = vpop.f32.mrf.mxu0
    %v2240 = vpop.f32.mrf.mxu0
    %2241 = vdwg.mxu0
    %v2242 = vxor.u32 %v2189, 2147483648
    %v2243 = vxor.u32 %v2192, 2147483648
    %v2244 = vxor.u32 %v2197, 2147483648
    %v2245 = vxor.u32 %v2200, 2147483648
    %v2246 = vxor.u32 %v2205, 2147483648
    %v2247 = vxor.u32 %v2208, 2147483648
    %v2248 = vxor.u32 %v2213, 2147483648
    %v2249 = vxor.u32 %v2216, 2147483648
    %v2250 = vxor.u32 %v2221, 2147483648
    %v2251 = vxor.u32 %v2224, 2147483648
    %v2252 = vxor.u32 %v2229, 2147483648
    %v2253 = vxor.u32 %v2232, 2147483648
    %v2254 = vxor.u32 %v2237, 2147483648
    %v2255 = vmul.f32 %v2242, 1.442695
    %v2256 = vpow.pop %v2255
    %v2257 = vmul.f32 %v2243, 1.442695
    %v2258 = vpow.pop %v2257
    %v2259 = vmul.f32 %v2244, 1.442695
    %v2260 = vpow.pop %v2259
    %v2261 = vmul.f32 %v2245, 1.442695
    %v2262 = vpow.pop %v2261
    %v2263 = vmul.f32 %v2246, 1.442695
    %v2264 = vpow.pop %v2263
    %v2265 = vmul.f32 %v2247, 1.442695
    %v2266 = vpow.pop %v2265
    %v2267 = vmul.f32 %v2248, 1.442695
    %v2268 = vpow.pop %v2267
    %v2269 = vmul.f32 %v2249, 1.442695
    %v2270 = vpow.pop %v2269
    %v2271 = vmul.f32 %v2250, 1.442695
    %v2272 = vpow.pop %v2271
    %v2273 = vmul.f32 %v2251, 1.442695
    %v2274 = vpow.pop %v2273
    %v2275 = vmul.f32 %v2252, 1.442695
    %v2276 = vpow.pop %v2275
    %v2277 = vmul.f32 %v2253, 1.442695
    %v2278 = vpow.pop %v2277
    %v2279 = vmul.f32 %v2254, 1.442695
    %v2280 = vpow.pop %v2279
    %v2281 = vadd.f32 %v2256, 1.0
    %v2282 = vadd.f32 %v2258, 1.0
    %v2283 = vadd.f32 %v2260, 1.0
    %v2284 = vadd.f32 %v2262, 1.0
    %v2285 = vadd.f32 %v2264, 1.0
    %v2286 = vadd.f32 %v2266, 1.0
    %v2287 = vadd.f32 %v2268, 1.0
    %v2288 = vadd.f32 %v2270, 1.0
    %v2289 = vadd.f32 %v2272, 1.0
    %v2290 = vadd.f32 %v2274, 1.0
    %v2291 = vadd.f32 %v2276, 1.0
    %v2292 = vadd.f32 %v2278, 1.0
    %v2293 = vadd.f32 %v2280, 1.0
    %v2294 = vrcp.pop %v2281
    %v2295 = vmul.f32 1.0, %v2294
    %v2296 = vrcp.pop %v2282
    %v2297 = vmul.f32 1.0, %v2296
    %v2298 = vrcp.pop %v2283
    %v2299 = vmul.f32 1.0, %v2298
    %v2300 = vrcp.pop %v2284
    %v2301 = vmul.f32 1.0, %v2300
    %v2302 = vrcp.pop %v2285
    %v2303 = vmul.f32 1.0, %v2302
    %v2304 = vrcp.pop %v2286
    %v2305 = vmul.f32 1.0, %v2304
    %v2306 = vrcp.pop %v2287
    %v2307 = vmul.f32 1.0, %v2306
    %v2308 = vrcp.pop %v2288
    %v2309 = vmul.f32 1.0, %v2308
    %v2310 = vrcp.pop %v2289
    %v2311 = vmul.f32 1.0, %v2310
    %v2312 = vrcp.pop %v2290
    %v2313 = vmul.f32 1.0, %v2312
    %v2314 = vrcp.pop %v2291
    %v2315 = vmul.f32 1.0, %v2314
    %v2316 = vrcp.pop %v2292
    %v2317 = vmul.f32 1.0, %v2316
    %v2318 = vrcp.pop %v2293
    %v2319 = vmul.f32 1.0, %v2318
    %vm2320 = vcmask 130048
    %2321 = vst.msk [vmem:[%s8] sm:$0xff] %vm2320, %v2295
    %2322 = vst.msk [vmem:[%s8 + $0x8] sm:$0xff] %vm2320, %v2297
    %2323 = vst.msk [vmem:[%s8 + $0x10] sm:$0xff] %vm2320, %v2299
    %2324 = vst.msk [vmem:[%s8 + $0x18] sm:$0xff] %vm2320, %v2301
    %2325 = vst.msk [vmem:[%s8 + $0x20] sm:$0xff] %vm2320, %v2303
    %2326 = vst.msk [vmem:[%s8 + $0x28] sm:$0xff] %vm2320, %v2305
    %2327 = vst.msk [vmem:[%s8 + $0x30] sm:$0xff] %vm2320, %v2307
    %2328 = vst.msk [vmem:[%s8 + $0x38] sm:$0xff] %vm2320, %v2309
    %2329 = vst.msk [vmem:[%s8 + $0x40] sm:$0xff] %vm2320, %v2311
    %2330 = vst.msk [vmem:[%s8 + $0x48] sm:$0xff] %vm2320, %v2313
    %2331 = vst.msk [vmem:[%s8 + $0x50] sm:$0xff] %vm2320, %v2315
    %2332 = vst.msk [vmem:[%s8 + $0x58] sm:$0xff] %vm2320, %v2317
    %vm2333 = vcmask 123904
    %2334 = vst.msk [vmem:[%s8 + $0x60] sm:$0x3] %vm2333, %v2319
    // Predicated region
    $region38: #{decoder_forward.1} parent=1 // pred_check
      _
    $region39: #{decoder_forward.1} parent=1 // pred_check_branch
      %2336 = sbr.rel (0) target = $region41
    $region40: #{decoder_forward.1} parent=1 // pred_region
      _
    $region41: #{decoder_forward.1} parent=1 // pred_fallthru
      _
    // Predicated region
    $region42: #{decoder_forward.1} parent=1 // pred_check
      _
    $region43: #{decoder_forward.1} parent=1 // pred_check_branch
      %2338 = sbr.rel (0) target = $region45
    $region44: #{decoder_forward.1} parent=1 // pred_region
      _
    $region45: #{decoder_forward.1} parent=1 // pred_fallthru
      _
    %2339 = vsyncpa [#allocation3], 1

</llo_original>
